<compile_context>
chip_gen: v7x
topology: tpu7x:2x2x1
jax: 0.10.0
libtpu: 0.0.40
codegen_flags: <defaults>
</compile_context>

<pallas_src>
import functools
import math

import jax
import jax.numpy as jnp
from jax.experimental import pallas as pl
from jax.experimental.pallas import tpu as pltpu


_NEG_BIG = -9.0e15   # the module's zero_vec sentinel (representable in bf16)


# ---------------------------------------------------------------------------
# Stage 1: node projection + mask-bias emission.
#   acc  = adj @ x                       (accumulated over contraction tiles)
#   h    = acc @ W1 + x @ W2             (== cat([acc, x], 1) @ W)
#   bias = where(cat([acc, x], 1) > 0, 0, -9e15)   as bf16
# ---------------------------------------------------------------------------
def _proj_kernel(adj_ref, x_k_ref, x_q_ref, w1_ref, w2_ref,
                 h_ref, bias_ref, acc_ref, *, feat):
    kc = pl.program_id(1)

    @pl.when(kc == 0)
    def _():
        acc_ref[...] = jnp.zeros_like(acc_ref)

    # bf16 (or f32) MXU operands, f32 accumulation.
    acc_ref[...] += jnp.dot(adj_ref[...], x_k_ref[...],
                            preferred_element_type=jnp.float32)

    @pl.when(kc == pl.num_programs(1) - 1)
    def _():
        sup = acc_ref[...]                                   # (tm, feat) f32
        h = (jnp.dot(sup.astype(w1_ref.dtype), w1_ref[...],
                     preferred_element_type=jnp.float32) +
             jnp.dot(x_q_ref[...], w2_ref[...],
                     preferred_element_type=jnp.float32))
        h_ref[...] = h.astype(h_ref.dtype)
        # Additive softmax mask bias.  Left half from sup = adj@x, right half
        # from this row tile's own features x (both already in VMEM).
        bias_ref[:, :feat] = jnp.where(sup > 0, 0.0, _NEG_BIG
                                       ).astype(bias_ref.dtype)
        bias_ref[:, feat:] = jnp.where(x_q_ref[...] > 0, 0.0, _NEG_BIG
                                       ).astype(bias_ref.dtype)


# ---------------------------------------------------------------------------
# Stage 2: masked GAT attention, flash-style online softmax + ELU.
# Grid = (row tiles [parallel], key tiles [arbitrary]).
# The f32 output block doubles as the accumulator.
# ---------------------------------------------------------------------------
def _attn_kernel(h_ref, bias_ref, e_row_ref, e_col_ref, out_ref,
                 m_ref, l_ref, *, alpha, tk):
    k = pl.program_id(1)

    @pl.when(k == 0)
    def _():
        m_ref[...] = jnp.full_like(m_ref, -jnp.inf)
        l_ref[...] = jnp.zeros_like(l_ref)
        out_ref[...] = jnp.zeros_like(out_ref)

    # Rank-1 logits (row/col terms precomputed outside the kernel):
    #   e[i, j] = leakyrelu(h_i.a1 + h_j.a2) + bias[i, j]
    e = e_row_ref[...] + e_col_ref[...]                      # (tm, tk) f32
    e = jnp.where(e > 0, e, alpha * e)                       # LeakyReLU(alpha)
    e = e + bias_ref[...].astype(jnp.float32)                # additive mask

    # Online softmax; normalization deferred to the epilogue.
    m_prev = m_ref[...]
    m_new = jnp.maximum(m_prev, jnp.max(e, axis=-1, keepdims=True))
    corr = jnp.exp(m_prev - m_new)
    p = jnp.exp(e - m_new)                                   # (tm, tk)
    l_ref[...] = corr * l_ref[...] + jnp.sum(p, axis=-1, keepdims=True)

    # Key tile sliced from the resident full-h block.
    start = pl.multiple_of(k * tk, tk)
    h_k = h_ref[pl.ds(start, tk), :]                         # (tk, out_p)
    out_ref[...] = corr * out_ref[...] + jnp.dot(
        p.astype(h_k.dtype), h_k, preferred_element_type=jnp.float32)
    m_ref[...] = m_new

    @pl.when(k == pl.num_programs(1) - 1)
    def _():
        # TODO(synk): attention dropout is identity in eval mode (training=False).
        h_prime = out_ref[...] * pl.reciprocal(l_ref[...], approx=False)
        # concat=True -> ELU
        out_ref[...] = jnp.where(h_prime > 0, h_prime, jnp.expm1(h_prime))


# ---------------------------------------------------------------------------
# Wrapper
# ---------------------------------------------------------------------------
def _default_vmem_limit():
    # ~108 MiB on v5e/v6e (128 MiB physical VMEM), ~54 MiB on v7x (64 MiB).
    try:
        cap = pltpu.get_tpu_info().vmem_capacity_bytes
        return int(min(112 * 1024 * 1024, int(cap * 0.85)))
    except Exception:
        return 48 * 1024 * 1024


def gat_forward(adj, x, W, a, *, alpha=0.2, tm=256, tk=256, tkc=256,
                dtype=jnp.bfloat16, vmem_limit_bytes=None):
    N, feat = x.shape
    in_features, out_features = W.shape
    assert adj.shape == (N, N)
    assert in_features == 2 * feat, "W rows must equal 2*F (cat([adj@x, x]))"
    # The reference's `support > 0` mask (shape (N, 2F)) only broadcasts
    # against the (N, N) logits when N == 2F.
    assert N == 2 * feat, "GraphAttentionLayer forward requires N == 2*F"
    assert a.shape == (2 * out_features, 1)

    tm, tk, tkc = min(tm, N), min(tk, N), min(tkc, N)
    assert N % tm == 0 and N % tk == 0 and N % tkc == 0
    if vmem_limit_bytes is None:
        vmem_limit_bytes = _default_vmem_limit()

    # Lane-dense output: pad out_features to a multiple of 128 with zero
    # columns of W / zero rows of a (exact — padded h columns are 0).
    out_p = ((out_features + 127) // 128) * 128
    pad = out_p - out_features

    W32 = W.astype(jnp.float32)
    a32 = a.astype(jnp.float32)
    if pad:
        W32 = jnp.pad(W32, ((0, 0), (0, pad)))
        a1_col = jnp.pad(a32[:out_features], ((0, pad), (0, 0)))
        a2_col = jnp.pad(a32[out_features:], ((0, pad), (0, 0)))
    else:
        a1_col = a32[:out_features]
        a2_col = a32[out_features:]

    # Storage dtype carried all the way through HBM (bf16 default): halves DMA
    # bytes and VMEM tile footprint, removes per-tile f32->bf16 packs.
    adj_s = adj.astype(dtype)
    x_s = x.astype(dtype)
    W1 = W32[:feat].astype(dtype)        # applied to adj @ x
    W2 = W32[feat:].astype(dtype)        # applied to x

    n_row, n_kc, n_col = N // tm, N // tkc, N // tk

    cparams = pltpu.CompilerParams(
        dimension_semantics=("parallel", "arbitrary"),
        vmem_limit_bytes=int(vmem_limit_bytes))

    # ---- stage 1: h = cat([adj@x, x],1) @ W ; bias = mask of support>0 ------
    h, bias = pl.pallas_call(
        functools.partial(_proj_kernel, feat=feat),
        out_shape=(jax.ShapeDtypeStruct((N, out_p), dtype),
                   jax.ShapeDtypeStruct((N, N), jnp.bfloat16)),
        grid_spec=pltpu.PrefetchScalarGridSpec(
            num_scalar_prefetch=0,
            grid=(n_row, n_kc),
            in_specs=[
                pl.BlockSpec((tm, tkc), lambda i, kc: (i, kc)),     # adj tile
                pl.BlockSpec((tkc, feat), lambda i, kc: (kc, 0)),   # x (contraction)
                pl.BlockSpec((tm, feat), lambda i, kc: (i, 0)),     # x (own rows)
                pl.BlockSpec((feat, out_p), lambda i, kc: (0, 0)),  # W1
                pl.BlockSpec((feat, out_p), lambda i, kc: (0, 0)),  # W2
            ],
            out_specs=[
                pl.BlockSpec((tm, out_p), lambda i, kc: (i, 0)),    # h
                pl.BlockSpec((tm, N), lambda i, kc: (i, 0)),        # mask bias
            ],
            # f32 accumulator for adj@x (also feeds the mask, so it cannot be
            # folded into an output block).
            scratch_shapes=[pltpu.VMEM((tm, feat), jnp.float32)],
        ),
        compiler_params=cparams,
    )(adj_s, x_s, x_s, W1, W2)

    # ---- rank-1 logit terms, hoisted out of the stage-2 inner loop ----------
    h32 = h.astype(jnp.float32)
    e_row = jnp.dot(h32, a1_col)          # (N, 1)
    e_col = jnp.dot(h32, a2_col).T        # (1, N)  lane-dense

    # ---- stage 2: flash-style masked attention + ELU ------------------------
    out = pl.pallas_call(
        functools.partial(_attn_kernel, alpha=float(alpha), tk=tk),
        out_shape=jax.ShapeDtypeStruct((N, out_p), jnp.float32),
        grid_spec=pltpu.PrefetchScalarGridSpec(
            num_scalar_prefetch=0,
            grid=(n_row, n_col),
            in_specs=[
                pl.BlockSpec((N, out_p), lambda i, k: (0, 0)),      # h (resident)
                pl.BlockSpec((tm, tk), lambda i, k: (i, k)),        # mask bias
                pl.BlockSpec((tm, 1), lambda i, k: (i, 0)),         # e_row
                pl.BlockSpec((1, tk), lambda i, k: (0, k)),         # e_col
            ],
            out_specs=pl.BlockSpec((tm, out_p), lambda i, k: (i, 0)),
            scratch_shapes=[
                pltpu.VMEM((tm, 1), jnp.float32),   # running max
                pltpu.VMEM((tm, 1), jnp.float32),   # running denom
            ],
        ),
        compiler_params=cparams,
    )(h, bias, e_row, e_col)

    return out[:, :out_features]


# ---------------------------------------------------------------------------
# Plain-JAX reference mirroring the PyTorch forward literally (f32).
# ---------------------------------------------------------------------------
def gat_reference(adj, x, W, a, *, alpha=0.2):
    sup = adj @ x
    support = jnp.concatenate([sup, x], axis=1)
    h = support @ W
    N = h.shape[0]
    out = W.shape[1]
    a_input = jnp.concatenate(
        [jnp.tile(h, (1, N)).reshape(N * N, -1), jnp.tile(h, (N, 1))], axis=1
    ).reshape(N, -1, 2 * out)
    e = jnp.squeeze(a_input @ a, axis=2)
    e = jnp.where(e > 0, e, alpha * e)
    attention = jnp.where(support > 0, e, -9e15)
    attention = jax.nn.softmax(attention, axis=1)
    h_prime = attention @ h
    return jnp.where(h_prime > 0, h_prime, jnp.expm1(h_prime))


def xavier_uniform(key, shape, gain):
    fan_in, fan_out = shape[1], shape[0]  # torch convention for 2-D tensors
    bound = gain * math.sqrt(6.0 / (fan_in + fan_out))
    return jax.random.uniform(key, shape, jnp.float32, minval=-bound, maxval=bound)


if __name__ == "__main__":
    # Small-but-tileable shapes consistent with the forward: N == 2*F so the
    # (N, 2F) `support > 0` mask broadcasts against the (N, N) logits; the
    # 128-wide out_features gives a lane-dense output; tm=128 -> n_row=2 so
    # both v7x TensorCores get a row tile.
    N = 256            # number of nodes
    F = 128            # raw feature dim (N == 2*F)
    in_features = 2 * F
    out_features = 128
    alpha = 0.2

    key = jax.random.PRNGKey(0)
    kx, kadj, kW, ka = jax.random.split(key, 4)

    x = jax.random.normal(kx, (N, F), jnp.float32)
    # sparse-ish non-negative adjacency with self loops
    adj_rand = jax.random.uniform(kadj, (N, N), jnp.float32)
    adj = jnp.where(adj_rand > 0.7, adj_rand, 0.0) + jnp.eye(N, dtype=jnp.float32)

    W = xavier_uniform(kW, (in_features, out_features), gain=1.414)
    a = xavier_uniform(ka, (2 * out_features, 1), gain=1.414)

    # Exact-semantics f32 path (2x2 grid), checked against the literal reference.
    out = gat_forward(adj, x, W, a, alpha=alpha, tm=128, tk=128, tkc=128,
                      dtype=jnp.float32)
    out = jax.block_until_ready(out)

    ref = gat_reference(adj, x, W, a, alpha=alpha)
    assert out.shape == (N, out_features)
    # Tolerance accounts for tiled f32 accumulation order + online softmax;
    # real bugs (e.g. a flipped mask bit) produce O(0.1-10) errors.
    assert jnp.allclose(out, ref, rtol=2e-3, atol=2e-3), "mismatch vs reference"

    # Default fast path: bf16 storage + bf16 MXU operands with f32 accumulation.
    # Not bit-checked: the module thresholds a matmul result (`support > 0`),
    # so bf16 rounding can legitimately flip mask bits vs the f32 reference.
    out_bf16 = jax.block_until_ready(gat_forward(adj, x, W, a, alpha=alpha))
    assert out_bf16.shape == (N, out_features)
    assert bool(jnp.all(jnp.isfinite(out_bf16)))

    print("KERNEL_OK")
</pallas_src>

<mosaic_0001>
module attributes {stable_mosaic.version = 11 : i64} {
  func.func @_proj_kernel(%arg0: i32, %arg1: i32, %arg2: memref<128x128xf32, #tpu.memory_space<vmem>>, %arg3: memref<128x128xf32, #tpu.memory_space<vmem>>, %arg4: memref<128x128xf32, #tpu.memory_space<vmem>>, %arg5: memref<128x128xf32, #tpu.memory_space<vmem>>, %arg6: memref<128x128xf32, #tpu.memory_space<vmem>>, %arg7: memref<128x128xf32, #tpu.memory_space<vmem>>, %arg8: memref<128x256xbf16, #tpu.memory_space<vmem>>, %arg9: memref<128x128xf32, #tpu.memory_space<vmem>>) attributes {dimension_semantics = [#tpu.dimension_semantics<parallel>, #tpu.dimension_semantics<arbitrary>], iteration_bounds = array<i64: 2, 2>, scalar_prefetch = 0 : i64, scratch_operands = 1 : i64, tpu.core_type = #tpu.core_type<tc>, window_params = [{transform_indices = @transform_0, window_bounds = array<i64: 128, 128>}, {transform_indices = @transform_1, window_bounds = array<i64: 128, 128>}, {transform_indices = @transform_2, window_bounds = array<i64: 128, 128>}, {pipeline_mode = #tpu.pipeline_mode<synchronous>, transform_indices = @transform_3, window_bounds = array<i64: 128, 128>}, {pipeline_mode = #tpu.pipeline_mode<synchronous>, transform_indices = @transform_4, window_bounds = array<i64: 128, 128>}, {transform_indices = @transform_5, window_bounds = array<i64: 128, 128>}, {transform_indices = @transform_6, window_bounds = array<i64: 128, 256>}]} {
    %c0_i32 = arith.constant 0 : i32
    %0 = arith.cmpi eq, %arg1, %c0_i32 : i32
    %1 = arith.extui %0 : i1 to i32
    %c0_i32_0 = arith.constant 0 : i32
    %2 = arith.cmpi ne, %1, %c0_i32_0 : i32
    scf.if %2 {
      %cst_9 = arith.constant 0.000000e+00 : f32
      %12 = vector.broadcast %cst_9 : f32 to vector<128x128xf32>
      %c0_10 = arith.constant 0 : index
      %c0_11 = arith.constant 0 : index
      %13 = vector.load %arg9[%c0_10, %c0_11] : memref<128x128xf32, #tpu.memory_space<vmem>>, vector<128x128xf32>
      tpu.vector_store %arg9[%c0_10, %c0_11], %12 {strides = array<i32>} : memref<128x128xf32, #tpu.memory_space<vmem>>, vector<128x128xf32>,
    } else {
    }
    %c0 = arith.constant 0 : index
    %c0_1 = arith.constant 0 : index
    %3 = vector.load %arg9[%c0, %c0_1] : memref<128x128xf32, #tpu.memory_space<vmem>>, vector<128x128xf32>
    %c0_2 = arith.constant 0 : index
    %c0_3 = arith.constant 0 : index
    %4 = vector.load %arg2[%c0_2, %c0_3] : memref<128x128xf32, #tpu.memory_space<vmem>>, vector<128x128xf32>
    %c0_4 = arith.constant 0 : index
    %c0_5 = arith.constant 0 : index
    %5 = vector.load %arg3[%c0_4, %c0_5] : memref<128x128xf32, #tpu.memory_space<vmem>>, vector<128x128xf32>
    %cst = arith.constant dense<0.000000e+00> : vector<128x128xf32>
    %6 = tpu.matmul %4, %5, %cst {dimension_numbers = #tpu.dot_dimension_numbers<[1], [0], [0], [1], [0, 0, 1, 1], [], []>} : vector<128x128xf32>, vector<128x128xf32>, vector<128x128xf32> -> vector<128x128xf32>
    %7 = arith.addf %3, %6 : vector<128x128xf32>
    %c0_6 = arith.constant 0 : index
    %c0_7 = arith.constant 0 : index
    %8 = vector.load %arg9[%c0_6, %c0_7] : memref<128x128xf32, #tpu.memory_space<vmem>>, vector<128x128xf32>
    tpu.vector_store %arg9[%c0_6, %c0_7], %7 {strides = array<i32>} : memref<128x128xf32, #tpu.memory_space<vmem>>, vector<128x128xf32>,
    %c1_i32 = arith.constant 1 : i32
    %9 = arith.cmpi eq, %arg1, %c1_i32 : i32
    %10 = arith.extui %9 : i1 to i32
    %c0_i32_8 = arith.constant 0 : i32
    %11 = arith.cmpi ne, %10, %c0_i32_8 : i32
    scf.if %11 {
      %c0_9 = arith.constant 0 : index
      %c0_10 = arith.constant 0 : index
      %12 = vector.load %arg9[%c0_9, %c0_10] : memref<128x128xf32, #tpu.memory_space<vmem>>, vector<128x128xf32>
      %c0_11 = arith.constant 0 : index
      %c0_12 = arith.constant 0 : index
      %13 = vector.load %arg5[%c0_11, %c0_12] : memref<128x128xf32, #tpu.memory_space<vmem>>, vector<128x128xf32>
      %cst_13 = arith.constant dense<0.000000e+00> : vector<128x128xf32>
      %14 = tpu.matmul %12, %13, %cst_13 {dimension_numbers = #tpu.dot_dimension_numbers<[1], [0], [0], [1], [0, 0, 1, 1], [], []>} : vector<128x128xf32>, vector<128x128xf32>, vector<128x128xf32> -> vector<128x128xf32>
      %c0_14 = arith.constant 0 : index
      %c0_15 = arith.constant 0 : index
      %15 = vector.load %arg4[%c0_14, %c0_15] : memref<128x128xf32, #tpu.memory_space<vmem>>, vector<128x128xf32>
      %c0_16 = arith.constant 0 : index
      %c0_17 = arith.constant 0 : index
      %16 = vector.load %arg6[%c0_16, %c0_17] : memref<128x128xf32, #tpu.memory_space<vmem>>, vector<128x128xf32>
      %cst_18 = arith.constant dense<0.000000e+00> : vector<128x128xf32>
      %17 = tpu.matmul %15, %16, %cst_18 {dimension_numbers = #tpu.dot_dimension_numbers<[1], [0], [0], [1], [0, 0, 1, 1], [], []>} : vector<128x128xf32>, vector<128x128xf32>, vector<128x128xf32> -> vector<128x128xf32>
      %18 = arith.addf %14, %17 : vector<128x128xf32>
      %c0_19 = arith.constant 0 : index
      %c0_20 = arith.constant 0 : index
      %19 = vector.load %arg7[%c0_19, %c0_20] : memref<128x128xf32, #tpu.memory_space<vmem>>, vector<128x128xf32>
      tpu.vector_store %arg7[%c0_19, %c0_20], %18 {strides = array<i32>} : memref<128x128xf32, #tpu.memory_space<vmem>>, vector<128x128xf32>,
      %cst_21 = arith.constant 0.000000e+00 : f32
      %20 = vector.broadcast %cst_21 : f32 to vector<128x128xf32>
      %21 = arith.cmpf ogt, %12, %20 : vector<128x128xf32>
      %cst_22 = arith.constant 0.000000e+00 : f32
      %cst_23 = arith.constant -9.000000e+15 : f32
      %22 = vector.broadcast %cst_22 : f32 to vector<128x128xf32>
      %23 = vector.broadcast %cst_23 : f32 to vector<128x128xf32>
      %24 = arith.select %21, %22, %23 : vector<128x128xi1>, vector<128x128xf32>
      %25 = arith.truncf %24 : vector<128x128xf32> to vector<128x128xbf16>
      %c0_24 = arith.constant 0 : index
      %c0_25 = arith.constant 0 : index
      %26 = vector.load %arg8[%c0_24, %c0_25] : memref<128x256xbf16, #tpu.memory_space<vmem>>, vector<128x128xbf16>
      tpu.vector_store %arg8[%c0_24, %c0_25], %25 {strides = array<i32>} : memref<128x256xbf16, #tpu.memory_space<vmem>>, vector<128x128xbf16>,
      %c0_26 = arith.constant 0 : index
      %c0_27 = arith.constant 0 : index
      %27 = vector.load %arg4[%c0_26, %c0_27] : memref<128x128xf32, #tpu.memory_space<vmem>>, vector<128x128xf32>
      %cst_28 = arith.constant 0.000000e+00 : f32
      %28 = vector.broadcast %cst_28 : f32 to vector<128x128xf32>
      %29 = arith.cmpf ogt, %27, %28 : vector<128x128xf32>
      %cst_29 = arith.constant 0.000000e+00 : f32
      %cst_30 = arith.constant -9.000000e+15 : f32
      %30 = vector.broadcast %cst_29 : f32 to vector<128x128xf32>
      %31 = vector.broadcast %cst_30 : f32 to vector<128x128xf32>
      %32 = arith.select %29, %30, %31 : vector<128x128xi1>, vector<128x128xf32>
      %33 = arith.truncf %32 : vector<128x128xf32> to vector<128x128xbf16>
      %c0_31 = arith.constant 0 : index
      %c128 = arith.constant 128 : index
      %34 = vector.load %arg8[%c0_31, %c128] : memref<128x256xbf16, #tpu.memory_space<vmem>>, vector<128x128xbf16>
      tpu.vector_store %arg8[%c0_31, %c128], %33 {strides = array<i32>} : memref<128x256xbf16, #tpu.memory_space<vmem>>, vector<128x128xbf16>,
    } else {
    }
    return
  }
  func.func @transform_0(%arg0: i32, %arg1: i32) -> (i32, i32) {
    %c0_i32 = arith.constant 0 : i32
    return %arg0, %arg1 : i32, i32
  }
  func.func @transform_1(%arg0: i32, %arg1: i32) -> (i32, i32) {
    %c0_i32 = arith.constant 0 : i32
    %c0_i32_0 = arith.constant 0 : i32
    return %arg1, %c0_i32 : i32, i32
  }
  func.func @transform_2(%arg0: i32, %arg1: i32) -> (i32, i32) {
    %c0_i32 = arith.constant 0 : i32
    %c0_i32_0 = arith.constant 0 : i32
    return %arg0, %c0_i32 : i32, i32
  }
  func.func @transform_3(%arg0: i32, %arg1: i32) -> (i32, i32) {
    %c0_i32 = arith.constant 0 : i32
    %c0_i32_0 = arith.constant 0 : i32
    %c0_i32_1 = arith.constant 0 : i32
    return %c0_i32, %c0_i32_0 : i32, i32
  }
  func.func @transform_4(%arg0: i32, %arg1: i32) -> (i32, i32) {
    %c0_i32 = arith.constant 0 : i32
    %c0_i32_0 = arith.constant 0 : i32
    %c0_i32_1 = arith.constant 0 : i32
    return %c0_i32, %c0_i32_0 : i32, i32
  }
  func.func @transform_5(%arg0: i32, %arg1: i32) -> (i32, i32) {
    %c0_i32 = arith.constant 0 : i32
    %c0_i32_0 = arith.constant 0 : i32
    return %arg0, %c0_i32 : i32, i32
  }
  func.func @transform_6(%arg0: i32, %arg1: i32) -> (i32, i32) {
    %c0_i32 = arith.constant 0 : i32
    %c0_i32_0 = arith.constant 0 : i32
    return %arg0, %c0_i32 : i32, i32
  }
}

</mosaic_0001>

<llo_original>
// kernel: tpu_custom_call.1
$region0: #{tpu_custom_call.1}
  #allocation0 [shape = 'u32[]', space=smem, size = 0x4, offset = 0x4, fixed_abs, tag = 'smem constant byte address 0x4 - core index']
  #allocation1 [shape = 'u32[144,128]{1,0:T(1,128)}', space=vmem, size = 0x12000, scoped, tag = 'internal scratch']
  #allocation2 [shape = 'f32[128,128]{1,0:T(8,128)}', space=vmem, size = 0x10000, scoped, tag = 'scratch operand']
  %s0 = inlined_call_operand.hbm [shape: f32[256,256], index: 0, kind: input, shape index: {}]
  %s1 = inlined_call_operand.hbm [shape: f32[256,128], index: 1, kind: input, shape index: {}]
  %s2 = inlined_call_operand.hbm [shape: f32[256,128], index: 2, kind: input, shape index: {}]
  %s3 = inlined_call_operand.hbm [shape: f32[128,128], index: 3, kind: input, shape index: {}]
  %s4 = inlined_call_operand.hbm [shape: f32[128,128], index: 4, kind: input, shape index: {}]
  %s5 = inlined_call_operand.hbm [shape: f32[256,128], index: 5, kind: output, shape index: {0}]
  %s6 = inlined_call_operand.hbm [shape: bf16[256,256], index: 6, kind: output, shape index: {1}]
  %7 = xla_tuple %s5, %s6
  %s8 = sld [smem:[#allocation0]]
  $region89: #{tpu_custom_call.1} parent=0
    _
  %s10 = ssub.s32 1, %s8
  %s11 = scalar_select 0, %s10, %s8
  $region1: #{tpu_custom_call.1} parent=0
    #allocation3 [shape = 'u8[131072]{0}', space=vmem, size = 0x20000, scoped, tag = 'input window, operand 0']
    #allocation4 [shape = 's32[2]{0}', space=sflag, size = 0x8, scoped, tag = 'scoped memory for tpu_custom_call.1']
    #allocation5 [shape = 's32[2]{0}', space=sflag, size = 0x8, scoped, tag = 'scoped memory for tpu_custom_call.1']
    #allocation6 [shape = 'u8[131072]{0}', space=vmem, size = 0x20000, scoped, tag = 'input window, operand 1']
    #allocation7 [shape = 's32[2]{0}', space=sflag, size = 0x8, scoped, tag = 'scoped memory for tpu_custom_call.1']
    #allocation8 [shape = 'u8[131072]{0}', space=vmem, size = 0x20000, scoped, tag = 'input window, operand 2']
    #allocation9 [shape = 'u8[65536]{0}', space=vmem, size = 0x10000, scoped, tag = 'input window, operand 3, single buffered']
    #allocation10 [shape = 's32[1]{0}', space=sflag, size = 0x4, scoped, tag = 'scoped memory for tpu_custom_call.1']
    #allocation11 [shape = 'u8[65536]{0}', space=vmem, size = 0x10000, scoped, tag = 'input window, operand 4, single buffered']
    #allocation12 [shape = 'u8[131072]{0}', space=vmem, size = 0x20000, scoped, tag = 'output window, operand 0']
    #allocation13 [shape = 'u8[131072]{0}', space=vmem, size = 0x20000, scoped, tag = 'output window, operand 1']
    #allocation14 [shape = 's32[2]{0}', space=sflag, size = 0x8, scoped, tag = 'scoped memory for tpu_custom_call.1']
    %12 = vsyncpa [#allocation4], 0
    %s13 = scalar_lea.sflag [#allocation4], 1
    %14 = vsyncpa %s13, 0
    %15 = vsyncpa [#allocation7], 0
    %s16 = scalar_lea.sflag [#allocation7], 1
    %17 = vsyncpa %s16, 0
    %18 = vsyncpa [#allocation10], 0
    %19 = vsyncpa [#allocation5], 0
    %s20 = scalar_lea.sflag [#allocation5], 1
    %21 = vsyncpa %s20, 0
    %22 = vsyncpa [#allocation14], 0
    %s23 = scalar_lea.sflag [#allocation14], 1
    %24 = vsyncpa %s23, 0
    loop: start=0, step=1, limit=6
    $region2: #{tpu_custom_call.1} parent=1 // loop_pre_header
      _
    $region3: #{tpu_custom_call.1} parent=1 // loop_header
      %s26 = sphi 0, %s30
      %p27 = scmp.ge.s32.totalorder %s26, 6
      %s33 = sphi 0, %s45
      %s34 = sphi 0, %s41
      %s35 = sphi 0, %s33
      %s36 = sphi 0, %s34
      %s37 = sphi 0, %s35
      %s38 = sphi 0, %s36
      %s50 = sphi 0, %s52
      %s53 = sphi 0, %s50
      %s54 = sphi 0, %s53
      %s70 = sphi 0, %s54
      %s76 = sphi 0, %s78
      %s79 = sphi 0, %s76
      %s80 = sphi 0, %s79
      %s96 = sphi 0, %s80
      %s102 = sphi 0, %s104
      %s105 = sphi 0, %s102
      %s106 = sphi 0, %s105
      %s122 = sphi 0, %s106
      %s126 = sphi 0, %s126
      %s128 = sphi 0, %s126
      %s129 = sphi 0, %s128
      %s143 = sphi 0, %s129
      %s147 = sphi 0, %s147
      %s149 = sphi 0, %s147
      %s150 = sphi 0, %s149
      %s164 = sphi 0, %s150
      %s170 = sphi 0, %s172
      %s173 = sphi 0, %s170
      %s174 = sphi 0, %s173
      %s190 = sphi 0, %s174
      %s196 = sphi 0, %s198
      %s199 = sphi 0, %s196
      %s200 = sphi 0, %s199
      %s216 = sphi 0, %s200
    $region4: #{tpu_custom_call.1} parent=1 // loop_header_branch
      %29 = sbr.rel (%p27) target = $region8
    $region5: #{tpu_custom_call.1} parent=1 // loop_body
      %s31 = ssub.s32 %s26, 1
      %s32 = ssub.s32 %s26, 2
      %s39 = sadd.s32 1, %s34
      %p40 = scmp.ge.s32.totalorder %s39, 2
      %s41 = scalar_select %p40, 0, %s39
      %s42 = sadd.s32 1, %s33
      %s43 = scalar_select %p40, %s42, %s33
      %p44 = scmp.ge.s32.totalorder %s43, 2
      %s45 = scalar_select %p44, 0, %s43
      %s46 = ssub.s32 %s33, %s45
      %s47 = ssub.s32 %s34, %s41
      %s48 = sor.u32 %s46, %s47
      %p49 = scmp.eq.s32.totalorder %s48, 0
      %s51 = sadd.s32 %s50, 1
      %s52 = scalar_select %p49, %s50, %s51
      %p55 = pneg %p49
      %p56 = scmp.eq.s32.totalorder %s26, 3
      %p57 = por %p55, %p56
      %p58 = scmp.ne.s32.totalorder %s50, %s53
      %p59 = scmp.eq.s32.totalorder %s26, 0
      %p60 = por %p58, %p59
      %p61 = scmp.ne.s32.totalorder %s50, %s53
      %p62 = scmp.eq.s32.totalorder %s31, 3
      %p63 = por %p61, %p62
      %p64 = scmp.ne.s32.totalorder %s53, %s54
      %p65 = scmp.eq.s32.totalorder %s31, 0
      %p66 = por %p64, %p65
      %p67 = scmp.ne.s32.totalorder %s53, %s54
      %p68 = scmp.eq.s32.totalorder %s32, 3
      %p69 = por %p67, %p68
      %p71 = scmp.ne.s32.totalorder %s54, %s70
      %p72 = scmp.eq.s32.totalorder %s32, 0
      %p73 = por %p71, %p72
      %s74 = ssub.s32 %s34, %s41
      %p75 = scmp.eq.s32.totalorder %s74, 0
      %s77 = sadd.s32 %s76, 1
      %s78 = scalar_select %p75, %s76, %s77
      %p81 = pneg %p75
      %p82 = scmp.eq.s32.totalorder %s26, 3
      %p83 = por %p81, %p82
      %p84 = scmp.ne.s32.totalorder %s76, %s79
      %p85 = scmp.eq.s32.totalorder %s26, 0
      %p86 = por %p84, %p85
      %p87 = scmp.ne.s32.totalorder %s76, %s79
      %p88 = scmp.eq.s32.totalorder %s31, 3
      %p89 = por %p87, %p88
      %p90 = scmp.ne.s32.totalorder %s79, %s80
      %p91 = scmp.eq.s32.totalorder %s31, 0
      %p92 = por %p90, %p91
      %p93 = scmp.ne.s32.totalorder %s79, %s80
      %p94 = scmp.eq.s32.totalorder %s32, 3
      %p95 = por %p93, %p94
      %p97 = scmp.ne.s32.totalorder %s80, %s96
      %p98 = scmp.eq.s32.totalorder %s32, 0
      %p99 = por %p97, %p98
      %s100 = ssub.s32 %s33, %s45
      %p101 = scmp.eq.s32.totalorder %s100, 0
      %s103 = sadd.s32 %s102, 1
      %s104 = scalar_select %p101, %s102, %s103
      %p107 = pneg %p101
      %p108 = scmp.eq.s32.totalorder %s26, 3
      %p109 = por %p107, %p108
      %p110 = scmp.ne.s32.totalorder %s102, %s105
      %p111 = scmp.eq.s32.totalorder %s26, 0
      %p112 = por %p110, %p111
      %p113 = scmp.ne.s32.totalorder %s102, %s105
      %p114 = scmp.eq.s32.totalorder %s31, 3
      %p115 = por %p113, %p114
      %p116 = scmp.ne.s32.totalorder %s105, %s106
      %p117 = scmp.eq.s32.totalorder %s31, 0
      %p118 = por %p116, %p117
      %p119 = scmp.ne.s32.totalorder %s105, %s106
      %p120 = scmp.eq.s32.totalorder %s32, 3
      %p121 = por %p119, %p120
      %p123 = scmp.ne.s32.totalorder %s106, %s122
      %p124 = scmp.eq.s32.totalorder %s32, 0
      %p125 = por %p123, %p124
      %s127 = sadd.s32 %s126, 1
      %p130 = scmp.eq.s32.totalorder %s26, 3
      %p131 = scmp.ne.s32.totalorder %s126, %s128
      %p132 = scmp.eq.s32.totalorder %s26, 0
      %p133 = por %p131, %p132
      %p134 = scmp.ne.s32.totalorder %s126, %s128
      %p135 = scmp.eq.s32.totalorder %s31, 3
      %p136 = por %p134, %p135
      %p137 = scmp.ne.s32.totalorder %s128, %s129
      %p138 = scmp.eq.s32.totalorder %s31, 0
      %p139 = por %p137, %p138
      %p140 = scmp.ne.s32.totalorder %s128, %s129
      %p141 = scmp.eq.s32.totalorder %s32, 3
      %p142 = por %p140, %p141
      %p144 = scmp.ne.s32.totalorder %s129, %s143
      %p145 = scmp.eq.s32.totalorder %s32, 0
      %p146 = por %p144, %p145
      %s148 = sadd.s32 %s147, 1
      %p151 = scmp.eq.s32.totalorder %s26, 3
      %p152 = scmp.ne.s32.totalorder %s147, %s149
      %p153 = scmp.eq.s32.totalorder %s26, 0
      %p154 = por %p152, %p153
      %p155 = scmp.ne.s32.totalorder %s147, %s149
      %p156 = scmp.eq.s32.totalorder %s31, 3
      %p157 = por %p155, %p156
      %p158 = scmp.ne.s32.totalorder %s149, %s150
      %p159 = scmp.eq.s32.totalorder %s31, 0
      %p160 = por %p158, %p159
      %p161 = scmp.ne.s32.totalorder %s149, %s150
      %p162 = scmp.eq.s32.totalorder %s32, 3
      %p163 = por %p161, %p162
      %p165 = scmp.ne.s32.totalorder %s150, %s164
      %p166 = scmp.eq.s32.totalorder %s32, 0
      %p167 = por %p165, %p166
      %s168 = ssub.s32 %s33, %s45
      %p169 = scmp.eq.s32.totalorder %s168, 0
      %s171 = sadd.s32 %s170, 1
      %s172 = scalar_select %p169, %s170, %s171
      %p175 = pneg %p169
      %p176 = scmp.eq.s32.totalorder %s26, 3
      %p177 = por %p175, %p176
      %p178 = scmp.ne.s32.totalorder %s170, %s173
      %p179 = scmp.eq.s32.totalorder %s26, 0
      %p180 = por %p178, %p179
      %p181 = scmp.ne.s32.totalorder %s170, %s173
      %p182 = scmp.eq.s32.totalorder %s31, 3
      %p183 = por %p181, %p182
      %p184 = scmp.ne.s32.totalorder %s173, %s174
      %p185 = scmp.eq.s32.totalorder %s31, 0
      %p186 = por %p184, %p185
      %p187 = scmp.ne.s32.totalorder %s173, %s174
      %p188 = scmp.eq.s32.totalorder %s32, 3
      %p189 = por %p187, %p188
      %p191 = scmp.ne.s32.totalorder %s174, %s190
      %p192 = scmp.eq.s32.totalorder %s32, 0
      %p193 = por %p191, %p192
      %s194 = ssub.s32 %s33, %s45
      %p195 = scmp.eq.s32.totalorder %s194, 0
      %s197 = sadd.s32 %s196, 1
      %s198 = scalar_select %p195, %s196, %s197
      %p201 = pneg %p195
      %p202 = scmp.eq.s32.totalorder %s26, 3
      %p203 = por %p201, %p202
      %p204 = scmp.ne.s32.totalorder %s196, %s199
      %p205 = scmp.eq.s32.totalorder %s26, 0
      %p206 = por %p204, %p205
      %p207 = scmp.ne.s32.totalorder %s196, %s199
      %p208 = scmp.eq.s32.totalorder %s31, 3
      %p209 = por %p207, %p208
      %p210 = scmp.ne.s32.totalorder %s199, %s200
      %p211 = scmp.eq.s32.totalorder %s31, 0
      %p212 = por %p210, %p211
      %p213 = scmp.ne.s32.totalorder %s199, %s200
      %p214 = scmp.eq.s32.totalorder %s32, 3
      %p215 = por %p213, %p214
      %p217 = scmp.ne.s32.totalorder %s200, %s216
      %p218 = scmp.eq.s32.totalorder %s32, 0
      %p219 = por %p217, %p218
      %p220 = scmp.le.s32.totalorder 1, %s26
      %p221 = scmp.lt.s32.totalorder %s26, 5
      %p222 = pnand %p220, %p221
      %p223 = pneg %p222
      // Predicated region
      $region9: #{tpu_custom_call.1} parent=5 // pred_check
        _
      $region10: #{tpu_custom_call.1} parent=5 // pred_check_branch
        %225 = sbr.rel (%p222) target = $region12
      $region11: #{tpu_custom_call.1} parent=5 // pred_region
        %s226 = ssub.s32 %s26, 1
        // Predicated region
        $region13: #{tpu_custom_call.1} parent=11 // pred_check
          %p227 = pneg %p139
        $region14: #{tpu_custom_call.1} parent=11 // pred_check_branch
          %229 = sbr.rel (%p227) target = $region16
        $region15: #{tpu_custom_call.1} parent=11 // pred_region
          %s231 = ssub.s32 2048, 2048
          %232 = vsyncadd [#allocation10], %s231
          %s233 = sshll.u32 [#allocation9], 4
          %s234 = int_to_ptr.vmem [resolvable:$true] %s233
          %239 = dma.hbm_to_vmem [thread:$0]  %s3, 2048, %s234, [#allocation10], 128, 128, 8
        $region16: #{tpu_custom_call.1} parent=11 // pred_fallthru
          _
        // Predicated region
        $region17: #{tpu_custom_call.1} parent=11 // pred_check
          %p240 = pneg %p160
        $region18: #{tpu_custom_call.1} parent=11 // pred_check_branch
          %242 = sbr.rel (%p240) target = $region20
        $region19: #{tpu_custom_call.1} parent=11 // pred_region
          %s244 = ssub.s32 2048, 2048
          %245 = vsyncadd [#allocation10], %s244
          %s246 = sshll.u32 [#allocation11], 4
          %s247 = int_to_ptr.vmem [resolvable:$true] %s246
          %252 = dma.hbm_to_vmem [thread:$0]  %s4, 2048, %s247, [#allocation10], 128, 128, 8
        $region20: #{tpu_custom_call.1} parent=11 // pred_fallthru
          _
      $region12: #{tpu_custom_call.1} parent=5 // pred_fallthru
        _
      %p253 = scmp.lt.s32.totalorder %s26, 4
      // Predicated region
      $region21: #{tpu_custom_call.1} parent=5 // pred_check
        %p254 = pneg %p253
      $region22: #{tpu_custom_call.1} parent=5 // pred_check_branch
        %256 = sbr.rel (%p254) target = $region24
      $region23: #{tpu_custom_call.1} parent=5 // pred_region
        // Predicated region
        $region25: #{tpu_custom_call.1} parent=23 // pred_check
          %p257 = pneg %p60
        $region26: #{tpu_custom_call.1} parent=23 // pred_check_branch
          %259 = sbr.rel (%p257) target = $region28
        $region27: #{tpu_custom_call.1} parent=23 // pred_region
          %s260 = sand.u32 %s50, 1
          %s261 = scalar_lea.sflag [#allocation4], %s260
          %s262 = sand.u32 %s50, 1
          %s263 = smul.addr %s262, 128
          %s264 = scalar_lea.vmem [#allocation3], %s263
          %s265 = smul.u32 16, %s33
          %s267 = ssub.s32 2048, 2048
          %268 = vsyncadd %s261, %s267
          %s269 = smul.addr %s265, 2
          %s270 = sadd.s32 %s34, %s269
          %s271 = smul.addr %s270, 128
          %s272 = scalar_lea.hbm %s0, %s271
          %s273 = sshll.u32 %s264, 4
          %s274 = int_to_ptr.vmem [resolvable:$true] %s273
          %279 = dma.hbm_to_vmem [thread:$0]  %s272, 2048, %s274, %s261, 256, 128, 8
        $region28: #{tpu_custom_call.1} parent=23 // pred_fallthru
          _
        // Predicated region
        $region29: #{tpu_custom_call.1} parent=23 // pred_check
          %p280 = pneg %p86
        $region30: #{tpu_custom_call.1} parent=23 // pred_check_branch
          %282 = sbr.rel (%p280) target = $region32
        $region31: #{tpu_custom_call.1} parent=23 // pred_region
          %s283 = sand.u32 %s26, 1
          %s284 = scalar_lea.sflag [#allocation7], %s283
          %s285 = sand.u32 %s76, 1
          %s286 = smul.addr %s285, 128
          %s287 = scalar_lea.vmem [#allocation6], %s286
          %s288 = smul.u32 16, %s34
          %s290 = ssub.s32 2048, 2048
          %291 = vsyncadd %s284, %s290
          %s292 = smul.addr %s288, 128
          %s293 = scalar_lea.hbm %s1, %s292
          %s294 = sshll.u32 %s287, 4
          %s295 = int_to_ptr.vmem [resolvable:$true] %s294
          %300 = dma.hbm_to_vmem [thread:$0]  %s293, 2048, %s295, %s284, 128, 128, 8
        $region32: #{tpu_custom_call.1} parent=23 // pred_fallthru
          _
        // Predicated region
        $region33: #{tpu_custom_call.1} parent=23 // pred_check
          %p301 = pneg %p112
        $region34: #{tpu_custom_call.1} parent=23 // pred_check_branch
          %303 = sbr.rel (%p301) target = $region36
        $region35: #{tpu_custom_call.1} parent=23 // pred_region
          %s304 = sand.u32 %s26, 1
          %s305 = scalar_lea.sflag [#allocation7], %s304
          %s306 = sand.u32 %s102, 1
          %s307 = smul.addr %s306, 128
          %s308 = scalar_lea.vmem [#allocation8], %s307
          %s309 = smul.u32 16, %s33
          %s311 = ssub.s32 2048, 2048
          %312 = vsyncadd %s305, %s311
          %s313 = smul.addr %s309, 128
          %s314 = scalar_lea.hbm %s2, %s313
          %s315 = sshll.u32 %s308, 4
          %s316 = int_to_ptr.vmem [resolvable:$true] %s315
          %321 = dma.hbm_to_vmem [thread:$0]  %s314, 2048, %s316, %s305, 128, 128, 8
        $region36: #{tpu_custom_call.1} parent=23 // pred_fallthru
          _
      $region24: #{tpu_custom_call.1} parent=5 // pred_fallthru
        _
      %p322 = scmp.le.s32.totalorder 1, %s26
      %p323 = scmp.lt.s32.totalorder %s26, 5
      %p324 = pnand %p322, %p323
      %p325 = pneg %p324
      // Predicated region
      $region37: #{tpu_custom_call.1} parent=5 // pred_check
        _
      $region38: #{tpu_custom_call.1} parent=5 // pred_check_branch
        %327 = sbr.rel (%p324) target = $region40
      $region39: #{tpu_custom_call.1} parent=5 // pred_region
        %s328 = ssub.s32 %s26, 1
        %s329 = sand.u32 %s53, 1
        %s330 = scalar_lea.sflag [#allocation4], %s329
        %s331 = sand.u32 %s53, 1
        %s332 = smul.addr %s331, 128
        %s333 = scalar_lea.vmem [#allocation3], %s332
        // Predicated region
        $region41: #{tpu_custom_call.1} parent=39 // pred_check
          %p334 = pneg %p66
        $region42: #{tpu_custom_call.1} parent=39 // pred_check_branch
          %336 = sbr.rel (%p334) target = $region44
        $region43: #{tpu_custom_call.1} parent=39 // pred_region
          %337 = dma.done %s330, 2048
        $region44: #{tpu_custom_call.1} parent=39 // pred_fallthru
          _
        %s338 = sand.u32 %s31, 1
        %s339 = scalar_lea.sflag [#allocation7], %s338
        %s340 = sand.u32 %s79, 1
        %s341 = smul.addr %s340, 128
        %s342 = scalar_lea.vmem [#allocation6], %s341
        // Predicated region
        $region45: #{tpu_custom_call.1} parent=39 // pred_check
          %p343 = pneg %p92
        $region46: #{tpu_custom_call.1} parent=39 // pred_check_branch
          %345 = sbr.rel (%p343) target = $region48
        $region47: #{tpu_custom_call.1} parent=39 // pred_region
          %346 = dma.done %s339, 2048
        $region48: #{tpu_custom_call.1} parent=39 // pred_fallthru
          _
        %s347 = sand.u32 %s31, 1
        %s348 = scalar_lea.sflag [#allocation7], %s347
        %s349 = sand.u32 %s105, 1
        %s350 = smul.addr %s349, 128
        %s351 = scalar_lea.vmem [#allocation8], %s350
        // Predicated region
        $region49: #{tpu_custom_call.1} parent=39 // pred_check
          %p352 = pneg %p118
        $region50: #{tpu_custom_call.1} parent=39 // pred_check_branch
          %354 = sbr.rel (%p352) target = $region52
        $region51: #{tpu_custom_call.1} parent=39 // pred_region
          %355 = dma.done %s348, 2048
        $region52: #{tpu_custom_call.1} parent=39 // pred_fallthru
          _
        // Predicated region
        $region53: #{tpu_custom_call.1} parent=39 // pred_check
          %p356 = pneg %p139
        $region54: #{tpu_custom_call.1} parent=39 // pred_check_branch
          %358 = sbr.rel (%p356) target = $region56
        $region55: #{tpu_custom_call.1} parent=39 // pred_region
          %359 = dma.done [#allocation10], 2048
        $region56: #{tpu_custom_call.1} parent=39 // pred_fallthru
          _
        // Predicated region
        $region57: #{tpu_custom_call.1} parent=39 // pred_check
          %p360 = pneg %p160
        $region58: #{tpu_custom_call.1} parent=39 // pred_check_branch
          %362 = sbr.rel (%p360) target = $region60
        $region59: #{tpu_custom_call.1} parent=39 // pred_region
          %363 = dma.done [#allocation10], 2048
        $region60: #{tpu_custom_call.1} parent=39 // pred_fallthru
          _
        %s364 = sand.u32 %s53, 1
        %s365 = scalar_lea.sflag [#allocation4], %s364
        %s366 = sand.u32 %s53, 1
        %s367 = smul.addr %s366, 128
        %s368 = scalar_lea.vmem [#allocation3], %s367
        %p369 = pneg %p66
        %p370 = pneg %p63
        %s371 = sand.u32 %s31, 1
        %s372 = scalar_lea.sflag [#allocation7], %s371
        %s373 = sand.u32 %s79, 1
        %s374 = smul.addr %s373, 128
        %s375 = scalar_lea.vmem [#allocation6], %s374
        %p376 = pneg %p92
        %p377 = pneg %p89
        %s378 = sand.u32 %s31, 1
        %s379 = scalar_lea.sflag [#allocation7], %s378
        %s380 = sand.u32 %s105, 1
        %s381 = smul.addr %s380, 128
        %s382 = scalar_lea.vmem [#allocation8], %s381
        %p383 = pneg %p118
        %p384 = pneg %p115
        %p385 = pneg %p139
        %p386 = pneg %p136
        %p387 = pneg %p160
        %p388 = pneg %p157
        %p389 = pneg %p186
        %p390 = pneg %p183
        %s391 = sand.u32 %s173, 1
        %s392 = scalar_lea.sflag [#allocation5], %s391
        %s393 = sand.u32 %s173, 1
        %s394 = smul.addr %s393, 128
        %s395 = scalar_lea.vmem [#allocation12], %s394
        %p396 = pneg %p212
        %p397 = pneg %p209
        %s398 = sand.u32 %s199, 1
        %s399 = scalar_lea.sflag [#allocation14], %s398
        %s400 = sand.u32 %s199, 1
        %s401 = smul.addr %s400, 128
        %s402 = scalar_lea.vmem [#allocation13], %s401
        %s403 = smul.u32 16, %s35
        %s404 = smul.u32 16, %s36
        %s405 = smul.u32 16, %s35
        %s406 = smul.u32 16, %s35
        %s407 = smul.u32 16, %s35
        %p408 = scmp.eq.s32.totalorder %s36, 0
        // Predicated region
        $region61: #{tpu_custom_call.1} parent=39 // pred_check
          %p409 = pneg %p408
        $region62: #{tpu_custom_call.1} parent=39 // pred_check_branch
          %411 = sbr.rel (%p409) target = $region64
        $region63: #{tpu_custom_call.1} parent=39 // pred_region
          %412 = vst [vmem:[#allocation2] sm:$0xff] 0.0
          %413 = vst [vmem:[#allocation2 + $0x8] sm:$0xff] 0.0
          %414 = vst [vmem:[#allocation2 + $0x10] sm:$0xff] 0.0
          %415 = vst [vmem:[#allocation2 + $0x18] sm:$0xff] 0.0
          %416 = vst [vmem:[#allocation2 + $0x20] sm:$0xff] 0.0
          %417 = vst [vmem:[#allocation2 + $0x28] sm:$0xff] 0.0
          %418 = vst [vmem:[#allocation2 + $0x30] sm:$0xff] 0.0
          %419 = vst [vmem:[#allocation2 + $0x38] sm:$0xff] 0.0
          %420 = vst [vmem:[#allocation2 + $0x40] sm:$0xff] 0.0
          %421 = vst [vmem:[#allocation2 + $0x48] sm:$0xff] 0.0
          %422 = vst [vmem:[#allocation2 + $0x50] sm:$0xff] 0.0
          %423 = vst [vmem:[#allocation2 + $0x58] sm:$0xff] 0.0
          %424 = vst [vmem:[#allocation2 + $0x60] sm:$0xff] 0.0
          %425 = vst [vmem:[#allocation2 + $0x68] sm:$0xff] 0.0
          %426 = vst [vmem:[#allocation2 + $0x70] sm:$0xff] 0.0
          %427 = vst [vmem:[#allocation2 + $0x78] sm:$0xff] 0.0
        $region64: #{tpu_custom_call.1} parent=39 // pred_fallthru
          _
        %v428 = vld [vmem:[#allocation2] sm:$0xff]
        %v429 = vld [vmem:[#allocation2 + $0x8] sm:$0xff]
        %v430 = vld [vmem:[#allocation2 + $0x10] sm:$0xff]
        %v431 = vld [vmem:[#allocation2 + $0x18] sm:$0xff]
        %v432 = vld [vmem:[#allocation2 + $0x20] sm:$0xff]
        %v433 = vld [vmem:[#allocation2 + $0x28] sm:$0xff]
        %v434 = vld [vmem:[#allocation2 + $0x30] sm:$0xff]
        %v435 = vld [vmem:[#allocation2 + $0x38] sm:$0xff]
        %v436 = vld [vmem:[#allocation2 + $0x40] sm:$0xff]
        %v437 = vld [vmem:[#allocation2 + $0x48] sm:$0xff]
        %v438 = vld [vmem:[#allocation2 + $0x50] sm:$0xff]
        %v439 = vld [vmem:[#allocation2 + $0x58] sm:$0xff]
        %v440 = vld [vmem:[#allocation2 + $0x60] sm:$0xff]
        %v441 = vld [vmem:[#allocation2 + $0x68] sm:$0xff]
        %v442 = vld [vmem:[#allocation2 + $0x70] sm:$0xff]
        %v443 = vld [vmem:[#allocation2 + $0x78] sm:$0xff]
        %v444 = vld [vmem:[%s333] sm:$0xff]
        %v445 = vld [vmem:[%s333 + $0x8] sm:$0xff]
        %v446 = vld [vmem:[%s333 + $0x10] sm:$0xff]
        %v447 = vld [vmem:[%s333 + $0x18] sm:$0xff]
        %v448 = vld [vmem:[%s333 + $0x20] sm:$0xff]
        %v449 = vld [vmem:[%s333 + $0x28] sm:$0xff]
        %v450 = vld [vmem:[%s333 + $0x30] sm:$0xff]
        %v451 = vld [vmem:[%s333 + $0x38] sm:$0xff]
        %v452 = vld [vmem:[%s333 + $0x40] sm:$0xff]
        %v453 = vld [vmem:[%s333 + $0x48] sm:$0xff]
        %v454 = vld [vmem:[%s333 + $0x50] sm:$0xff]
        %v455 = vld [vmem:[%s333 + $0x58] sm:$0xff]
        %v456 = vld [vmem:[%s333 + $0x60] sm:$0xff]
        %v457 = vld [vmem:[%s333 + $0x68] sm:$0xff]
        %v458 = vld [vmem:[%s333 + $0x70] sm:$0xff]
        %v459 = vld [vmem:[%s333 + $0x78] sm:$0xff]
        %v460 = vld [vmem:[%s342] sm:$0xff]
        %v461 = vld [vmem:[%s342 + $0x8] sm:$0xff]
        %v462 = vld [vmem:[%s342 + $0x10] sm:$0xff]
        %v463 = vld [vmem:[%s342 + $0x18] sm:$0xff]
        %v464 = vld [vmem:[%s342 + $0x20] sm:$0xff]
        %v465 = vld [vmem:[%s342 + $0x28] sm:$0xff]
        %v466 = vld [vmem:[%s342 + $0x30] sm:$0xff]
        %v467 = vld [vmem:[%s342 + $0x38] sm:$0xff]
        %v468 = vld [vmem:[%s342 + $0x40] sm:$0xff]
        %v469 = vld [vmem:[%s342 + $0x48] sm:$0xff]
        %v470 = vld [vmem:[%s342 + $0x50] sm:$0xff]
        %v471 = vld [vmem:[%s342 + $0x58] sm:$0xff]
        %v472 = vld [vmem:[%s342 + $0x60] sm:$0xff]
        %v473 = vld [vmem:[%s342 + $0x68] sm:$0xff]
        %v474 = vld [vmem:[%s342 + $0x70] sm:$0xff]
        %v475 = vld [vmem:[%s342 + $0x78] sm:$0xff]
        %476 = vmatprep.subr.mxu0 0.0
        %477 = vmatpush1.msra.mxu0 %v460
        %478 = vmatprep.subr.mxu0 0.0
        %479 = vmatpush1.msra.mxu0 %v461
        %480 = vmatprep.subr.mxu0 0.0
        %481 = vmatpush1.msra.mxu0 %v462
        %482 = vmatprep.subr.mxu0 0.0
        %483 = vmatpush1.msra.mxu0 %v463
        %484 = vmatprep.subr.mxu0 0.0
        %485 = vmatpush1.msra.mxu0 %v464
        %486 = vmatprep.subr.mxu0 0.0
        %487 = vmatpush1.msra.mxu0 %v465
        %488 = vmatprep.subr.mxu0 0.0
        %489 = vmatpush1.msra.mxu0 %v466
        %490 = vmatprep.subr.mxu0 0.0
        %491 = vmatpush1.msra.mxu0 %v467
        %492 = vmatprep.subr.mxu0 0.0
        %493 = vmatpush1.msra.mxu0 %v468
        %494 = vmatprep.subr.mxu0 0.0
        %495 = vmatpush1.msra.mxu0 %v469
        %496 = vmatprep.subr.mxu0 0.0
        %497 = vmatpush1.msra.mxu0 %v470
        %498 = vmatprep.subr.mxu0 0.0
        %499 = vmatpush1.msra.mxu0 %v471
        %500 = vmatprep.subr.mxu0 0.0
        %501 = vmatpush1.msra.mxu0 %v472
        %502 = vmatprep.subr.mxu0 0.0
        %503 = vmatpush1.msra.mxu0 %v473
        %504 = vmatprep.subr.mxu0 0.0
        %505 = vmatpush1.msra.mxu0 %v474
        %506 = vmatprep.subr.mxu0 0.0
        %507 = vmatpush1.msra.mxu0 %v475
        %508 = vmatprep.subr.mxu0 0.0
        %509 = vmatpush1.msra.mxu0 0.0
        %510 = vmatprep.subr.mxu0 0.0
        %511 = vmatpush1.msra.mxu0 0.0
        %512 = vmatprep.subr.mxu0 0.0
        %513 = vmatpush1.msra.mxu0 0.0
        %514 = vmatprep.subr.mxu0 0.0
        %515 = vmatpush1.msra.mxu0 0.0
        %516 = vmatprep.subr.mxu0 0.0
        %517 = vmatpush1.msra.mxu0 0.0
        %518 = vmatprep.subr.mxu0 0.0
        %519 = vmatpush1.msra.mxu0 0.0
        %520 = vmatprep.subr.mxu0 0.0
        %521 = vmatpush1.msra.mxu0 0.0
        %522 = vmatprep.subr.mxu0 0.0
        %523 = vmatpush1.msra.mxu0 0.0
        %524 = vmatprep.subr.mxu0 0.0
        %525 = vmatpush1.msra.mxu0 0.0
        %526 = vmatprep.subr.mxu0 0.0
        %527 = vmatpush1.msra.mxu0 0.0
        %528 = vmatprep.subr.mxu0 0.0
        %529 = vmatpush1.msra.mxu0 0.0
        %530 = vmatprep.subr.mxu0 0.0
        %531 = vmatpush1.msra.mxu0 0.0
        %532 = vmatprep.subr.mxu0 0.0
        %533 = vmatpush1.msra.mxu0 0.0
        %534 = vmatprep.subr.mxu0 0.0
        %535 = vmatpush1.msra.mxu0 0.0
        %536 = vmatprep.subr.mxu0 0.0
        %537 = vmatpush1.msra.mxu0 0.0
        %538 = vmatprep.subr.mxu0 0.0
        %539 = vmatpush1.msra.mxu0 0.0
        %540 = vmatprep.mubr.f32.mxu0 0.0
        %541 = vmatmul.mubr.f32.gmra.mrb[0].mxu0 %v444
        %v542 = vpop.f32.mrb[0].mxu0
        %v543 = vadd.f32 0.0, %v542
        %v544 = vpop.f32.mrb[0].mxu0
        %545 = vmatprep.mubr.f32.mxu0 0.0
        %546 = vmatmul.mubr.f32.gmra.mrb[0].mxu0 %v445
        %v547 = vpop.f32.mrb[0].mxu0
        %v548 = vadd.f32 0.0, %v547
        %v549 = vpop.f32.mrb[0].mxu0
        %550 = vmatprep.mubr.f32.mxu0 0.0
        %551 = vmatmul.mubr.f32.gmra.mrb[0].mxu0 %v446
        %v552 = vpop.f32.mrb[0].mxu0
        %v553 = vadd.f32 0.0, %v552
        %v554 = vpop.f32.mrb[0].mxu0
        %555 = vmatprep.mubr.f32.mxu0 0.0
        %556 = vmatmul.mubr.f32.gmra.mrb[0].mxu0 %v447
        %v557 = vpop.f32.mrb[0].mxu0
        %v558 = vadd.f32 0.0, %v557
        %v559 = vpop.f32.mrb[0].mxu0
        %560 = vmatprep.mubr.f32.mxu0 0.0
        %561 = vmatmul.mubr.f32.gmra.mrb[0].mxu0 %v448
        %v562 = vpop.f32.mrb[0].mxu0
        %v563 = vadd.f32 0.0, %v562
        %v564 = vpop.f32.mrb[0].mxu0
        %565 = vmatprep.mubr.f32.mxu0 0.0
        %566 = vmatmul.mubr.f32.gmra.mrb[0].mxu0 %v449
        %v567 = vpop.f32.mrb[0].mxu0
        %v568 = vadd.f32 0.0, %v567
        %v569 = vpop.f32.mrb[0].mxu0
        %570 = vmatprep.mubr.f32.mxu0 0.0
        %571 = vmatmul.mubr.f32.gmra.mrb[0].mxu0 %v450
        %v572 = vpop.f32.mrb[0].mxu0
        %v573 = vadd.f32 0.0, %v572
        %v574 = vpop.f32.mrb[0].mxu0
        %575 = vmatprep.mubr.f32.mxu0 0.0
        %576 = vmatmul.mubr.f32.gmra.mrb[0].mxu0 %v451
        %v577 = vpop.f32.mrb[0].mxu0
        %v578 = vadd.f32 0.0, %v577
        %v579 = vpop.f32.mrb[0].mxu0
        %580 = vmatprep.mubr.f32.mxu0 0.0
        %581 = vmatmul.mubr.f32.gmra.mrb[0].mxu0 %v452
        %v582 = vpop.f32.mrb[0].mxu0
        %v583 = vadd.f32 0.0, %v582
        %v584 = vpop.f32.mrb[0].mxu0
        %585 = vmatprep.mubr.f32.mxu0 0.0
        %586 = vmatmul.mubr.f32.gmra.mrb[0].mxu0 %v453
        %v587 = vpop.f32.mrb[0].mxu0
        %v588 = vadd.f32 0.0, %v587
        %v589 = vpop.f32.mrb[0].mxu0
        %590 = vmatprep.mubr.f32.mxu0 0.0
        %591 = vmatmul.mubr.f32.gmra.mrb[0].mxu0 %v454
        %v592 = vpop.f32.mrb[0].mxu0
        %v593 = vadd.f32 0.0, %v592
        %v594 = vpop.f32.mrb[0].mxu0
        %595 = vmatprep.mubr.f32.mxu0 0.0
        %596 = vmatmul.mubr.f32.gmra.mrb[0].mxu0 %v455
        %v597 = vpop.f32.mrb[0].mxu0
        %v598 = vadd.f32 0.0, %v597
        %v599 = vpop.f32.mrb[0].mxu0
        %600 = vmatprep.mubr.f32.mxu0 0.0
        %601 = vmatmul.mubr.f32.gmra.mrb[0].mxu0 %v456
        %v602 = vpop.f32.mrb[0].mxu0
        %v603 = vadd.f32 0.0, %v602
        %v604 = vpop.f32.mrb[0].mxu0
        %605 = vmatprep.mubr.f32.mxu0 0.0
        %606 = vmatmul.mubr.f32.gmra.mrb[0].mxu0 %v457
        %v607 = vpop.f32.mrb[0].mxu0
        %v608 = vadd.f32 0.0, %v607
        %v609 = vpop.f32.mrb[0].mxu0
        %610 = vmatprep.mubr.f32.mxu0 0.0
        %611 = vmatmul.mubr.f32.gmra.mrb[0].mxu0 %v458
        %v612 = vpop.f32.mrb[0].mxu0
        %v613 = vadd.f32 0.0, %v612
        %v614 = vpop.f32.mrb[0].mxu0
        %615 = vmatprep.mubr.f32.mxu0 0.0
        %616 = vmatmul.mubr.f32.gmra.mrb[0].mxu0 %v459
        %v617 = vpop.f32.mrb[0].mxu0
        %v618 = vadd.f32 0.0, %v617
        %v619 = vpop.f32.mrb[0].mxu0
        %620 = vdwg.mxu0
        %v621 = vadd.f32 %v428, %v543
        %v622 = vadd.f32 %v429, %v548
        %v623 = vadd.f32 %v430, %v553
        %v624 = vadd.f32 %v431, %v558
        %v625 = vadd.f32 %v432, %v563
        %v626 = vadd.f32 %v433, %v568
        %v627 = vadd.f32 %v434, %v573
        %v628 = vadd.f32 %v435, %v578
        %v629 = vadd.f32 %v436, %v583
        %v630 = vadd.f32 %v437, %v588
        %v631 = vadd.f32 %v438, %v593
        %v632 = vadd.f32 %v439, %v598
        %v633 = vadd.f32 %v440, %v603
        %v634 = vadd.f32 %v441, %v608
        %v635 = vadd.f32 %v442, %v613
        %v636 = vadd.f32 %v443, %v618
        %637 = vst [vmem:[#allocation2] sm:$0xff] %v621
        %638 = vst [vmem:[#allocation2 + $0x8] sm:$0xff] %v622
        %639 = vst [vmem:[#allocation2 + $0x10] sm:$0xff] %v623
        %640 = vst [vmem:[#allocation2 + $0x18] sm:$0xff] %v624
        %641 = vst [vmem:[#allocation2 + $0x20] sm:$0xff] %v625
        %642 = vst [vmem:[#allocation2 + $0x28] sm:$0xff] %v626
        %643 = vst [vmem:[#allocation2 + $0x30] sm:$0xff] %v627
        %644 = vst [vmem:[#allocation2 + $0x38] sm:$0xff] %v628
        %645 = vst [vmem:[#allocation2 + $0x40] sm:$0xff] %v629
        %646 = vst [vmem:[#allocation2 + $0x48] sm:$0xff] %v630
        %647 = vst [vmem:[#allocation2 + $0x50] sm:$0xff] %v631
        %648 = vst [vmem:[#allocation2 + $0x58] sm:$0xff] %v632
        %649 = vst [vmem:[#allocation2 + $0x60] sm:$0xff] %v633
        %650 = vst [vmem:[#allocation2 + $0x68] sm:$0xff] %v634
        %651 = vst [vmem:[#allocation2 + $0x70] sm:$0xff] %v635
        %652 = vst [vmem:[#allocation2 + $0x78] sm:$0xff] %v636
        %p653 = scmp.eq.s32.totalorder %s36, 1
        // Predicated region
        $region65: #{tpu_custom_call.1} parent=39 // pred_check
          %p654 = pneg %p653
        $region66: #{tpu_custom_call.1} parent=39 // pred_check_branch
          %656 = sbr.rel (%p654) target = $region68
        $region67: #{tpu_custom_call.1} parent=39 // pred_region
          %v657 = vld [vmem:[#allocation2] sm:$0xff]
          %v658 = vld [vmem:[#allocation2 + $0x8] sm:$0xff]
          %v659 = vld [vmem:[#allocation2 + $0x10] sm:$0xff]
          %v660 = vld [vmem:[#allocation2 + $0x18] sm:$0xff]
          %v661 = vld [vmem:[#allocation2 + $0x20] sm:$0xff]
          %v662 = vld [vmem:[#allocation2 + $0x28] sm:$0xff]
          %v663 = vld [vmem:[#allocation2 + $0x30] sm:$0xff]
          %v664 = vld [vmem:[#allocation2 + $0x38] sm:$0xff]
          %v665 = vld [vmem:[#allocation2 + $0x40] sm:$0xff]
          %v666 = vld [vmem:[#allocation2 + $0x48] sm:$0xff]
          %v667 = vld [vmem:[#allocation2 + $0x50] sm:$0xff]
          %v668 = vld [vmem:[#allocation2 + $0x58] sm:$0xff]
          %v669 = vld [vmem:[#allocation2 + $0x60] sm:$0xff]
          %v670 = vld [vmem:[#allocation2 + $0x68] sm:$0xff]
          %v671 = vld [vmem:[#allocation2 + $0x70] sm:$0xff]
          %v672 = vld [vmem:[#allocation2 + $0x78] sm:$0xff]
          %v673 = vld [vmem:[#allocation9] sm:$0xff]
          %v674 = vld [vmem:[#allocation9 + $0x8] sm:$0xff]
          %v675 = vld [vmem:[#allocation9 + $0x10] sm:$0xff]
          %v676 = vld [vmem:[#allocation9 + $0x18] sm:$0xff]
          %v677 = vld [vmem:[#allocation9 + $0x20] sm:$0xff]
          %v678 = vld [vmem:[#allocation9 + $0x28] sm:$0xff]
          %v679 = vld [vmem:[#allocation9 + $0x30] sm:$0xff]
          %v680 = vld [vmem:[#allocation9 + $0x38] sm:$0xff]
          %v681 = vld [vmem:[#allocation9 + $0x40] sm:$0xff]
          %v682 = vld [vmem:[#allocation9 + $0x48] sm:$0xff]
          %v683 = vld [vmem:[#allocation9 + $0x50] sm:$0xff]
          %v684 = vld [vmem:[#allocation9 + $0x58] sm:$0xff]
          %v685 = vld [vmem:[#allocation9 + $0x60] sm:$0xff]
          %v686 = vld [vmem:[#allocation9 + $0x68] sm:$0xff]
          %v687 = vld [vmem:[#allocation9 + $0x70] sm:$0xff]
          %v688 = vld [vmem:[#allocation9 + $0x78] sm:$0xff]
          %v689 = vld [vmem:[%s351] sm:$0xff]
          %v690 = vld [vmem:[%s351 + $0x8] sm:$0xff]
          %v691 = vld [vmem:[%s351 + $0x10] sm:$0xff]
          %v692 = vld [vmem:[%s351 + $0x18] sm:$0xff]
          %v693 = vld [vmem:[%s351 + $0x20] sm:$0xff]
          %v694 = vld [vmem:[%s351 + $0x28] sm:$0xff]
          %v695 = vld [vmem:[%s351 + $0x30] sm:$0xff]
          %v696 = vld [vmem:[%s351 + $0x38] sm:$0xff]
          %v697 = vld [vmem:[%s351 + $0x40] sm:$0xff]
          %v698 = vld [vmem:[%s351 + $0x48] sm:$0xff]
          %v699 = vld [vmem:[%s351 + $0x50] sm:$0xff]
          %v700 = vld [vmem:[%s351 + $0x58] sm:$0xff]
          %v701 = vld [vmem:[%s351 + $0x60] sm:$0xff]
          %v702 = vld [vmem:[%s351 + $0x68] sm:$0xff]
          %v703 = vld [vmem:[%s351 + $0x70] sm:$0xff]
          %v704 = vld [vmem:[%s351 + $0x78] sm:$0xff]
          %v705 = vld [vmem:[#allocation11] sm:$0xff]
          %v706 = vld [vmem:[#allocation11 + $0x8] sm:$0xff]
          %v707 = vld [vmem:[#allocation11 + $0x10] sm:$0xff]
          %v708 = vld [vmem:[#allocation11 + $0x18] sm:$0xff]
          %v709 = vld [vmem:[#allocation11 + $0x20] sm:$0xff]
          %v710 = vld [vmem:[#allocation11 + $0x28] sm:$0xff]
          %v711 = vld [vmem:[#allocation11 + $0x30] sm:$0xff]
          %v712 = vld [vmem:[#allocation11 + $0x38] sm:$0xff]
          %v713 = vld [vmem:[#allocation11 + $0x40] sm:$0xff]
          %v714 = vld [vmem:[#allocation11 + $0x48] sm:$0xff]
          %v715 = vld [vmem:[#allocation11 + $0x50] sm:$0xff]
          %v716 = vld [vmem:[#allocation11 + $0x58] sm:$0xff]
          %v717 = vld [vmem:[#allocation11 + $0x60] sm:$0xff]
          %v718 = vld [vmem:[#allocation11 + $0x68] sm:$0xff]
          %v719 = vld [vmem:[#allocation11 + $0x70] sm:$0xff]
          %v720 = vld [vmem:[#allocation11 + $0x78] sm:$0xff]
          %721 = vmatprep.subr.mxu0 0.0
          %722 = vmatpush1.msra.mxu0 %v705
          %723 = vmatprep.subr.mxu0 0.0
          %724 = vmatpush1.msra.mxu0 %v706
          %725 = vmatprep.subr.mxu0 0.0
          %726 = vmatpush1.msra.mxu0 %v707
          %727 = vmatprep.subr.mxu0 0.0
          %728 = vmatpush1.msra.mxu0 %v708
          %729 = vmatprep.subr.mxu0 0.0
          %730 = vmatpush1.msra.mxu0 %v709
          %731 = vmatprep.subr.mxu0 0.0
          %732 = vmatpush1.msra.mxu0 %v710
          %733 = vmatprep.subr.mxu0 0.0
          %734 = vmatpush1.msra.mxu0 %v711
          %735 = vmatprep.subr.mxu0 0.0
          %736 = vmatpush1.msra.mxu0 %v712
          %737 = vmatprep.subr.mxu0 0.0
          %738 = vmatpush1.msra.mxu0 %v713
          %739 = vmatprep.subr.mxu0 0.0
          %740 = vmatpush1.msra.mxu0 %v714
          %741 = vmatprep.subr.mxu0 0.0
          %742 = vmatpush1.msra.mxu0 %v715
          %743 = vmatprep.subr.mxu0 0.0
          %744 = vmatpush1.msra.mxu0 %v716
          %745 = vmatprep.subr.mxu0 0.0
          %746 = vmatpush1.msra.mxu0 %v717
          %747 = vmatprep.subr.mxu0 0.0
          %748 = vmatpush1.msra.mxu0 %v718
          %749 = vmatprep.subr.mxu0 0.0
          %750 = vmatpush1.msra.mxu0 %v719
          %751 = vmatprep.subr.mxu0 0.0
          %752 = vmatpush1.msra.mxu0 %v720
          %753 = vmatprep.subr.mxu0 0.0
          %754 = vmatpush1.msra.mxu0 0.0
          %755 = vmatprep.subr.mxu0 0.0
          %756 = vmatpush1.msra.mxu0 0.0
          %757 = vmatprep.subr.mxu0 0.0
          %758 = vmatpush1.msra.mxu0 0.0
          %759 = vmatprep.subr.mxu0 0.0
          %760 = vmatpush1.msra.mxu0 0.0
          %761 = vmatprep.subr.mxu0 0.0
          %762 = vmatpush1.msra.mxu0 0.0
          %763 = vmatprep.subr.mxu0 0.0
          %764 = vmatpush1.msra.mxu0 0.0
          %765 = vmatprep.subr.mxu0 0.0
          %766 = vmatpush1.msra.mxu0 0.0
          %767 = vmatprep.subr.mxu0 0.0
          %768 = vmatpush1.msra.mxu0 0.0
          %769 = vmatprep.subr.mxu0 0.0
          %770 = vmatpush1.msra.mxu0 0.0
          %771 = vmatprep.subr.mxu0 0.0
          %772 = vmatpush1.msra.mxu0 0.0
          %773 = vmatprep.subr.mxu0 0.0
          %774 = vmatpush1.msra.mxu0 0.0
          %775 = vmatprep.subr.mxu0 0.0
          %776 = vmatpush1.msra.mxu0 0.0
          %777 = vmatprep.subr.mxu0 0.0
          %778 = vmatpush1.msra.mxu0 0.0
          %779 = vmatprep.subr.mxu0 0.0
          %780 = vmatpush1.msra.mxu0 0.0
          %781 = vmatprep.subr.mxu0 0.0
          %782 = vmatpush1.msra.mxu0 0.0
          %783 = vmatprep.subr.mxu0 0.0
          %784 = vmatpush1.msra.mxu0 0.0
          %785 = vmatprep.mubr.f32.mxu0 0.0
          %786 = vmatmul.mubr.f32.gmra.mrb[0].mxu0 %v689
          %v787 = vpop.f32.mrb[0].mxu0
          %v788 = vadd.f32 0.0, %v787
          %v789 = vpop.f32.mrb[0].mxu0
          %790 = vmatprep.mubr.f32.mxu0 0.0
          %791 = vmatmul.mubr.f32.gmra.mrb[0].mxu0 %v690
          %v792 = vpop.f32.mrb[0].mxu0
          %v793 = vadd.f32 0.0, %v792
          %v794 = vpop.f32.mrb[0].mxu0
          %795 = vmatprep.mubr.f32.mxu0 0.0
          %796 = vmatmul.mubr.f32.gmra.mrb[0].mxu0 %v691
          %v797 = vpop.f32.mrb[0].mxu0
          %v798 = vadd.f32 0.0, %v797
          %v799 = vpop.f32.mrb[0].mxu0
          %800 = vmatprep.mubr.f32.mxu0 0.0
          %801 = vmatmul.mubr.f32.gmra.mrb[0].mxu0 %v692
          %v802 = vpop.f32.mrb[0].mxu0
          %v803 = vadd.f32 0.0, %v802
          %v804 = vpop.f32.mrb[0].mxu0
          %805 = vmatprep.mubr.f32.mxu0 0.0
          %806 = vmatmul.mubr.f32.gmra.mrb[0].mxu0 %v693
          %v807 = vpop.f32.mrb[0].mxu0
          %v808 = vadd.f32 0.0, %v807
          %v809 = vpop.f32.mrb[0].mxu0
          %810 = vmatprep.mubr.f32.mxu0 0.0
          %811 = vmatmul.mubr.f32.gmra.mrb[0].mxu0 %v694
          %v812 = vpop.f32.mrb[0].mxu0
          %v813 = vadd.f32 0.0, %v812
          %v814 = vpop.f32.mrb[0].mxu0
          %815 = vmatprep.mubr.f32.mxu0 0.0
          %816 = vmatmul.mubr.f32.gmra.mrb[0].mxu0 %v695
          %v817 = vpop.f32.mrb[0].mxu0
          %v818 = vadd.f32 0.0, %v817
          %v819 = vpop.f32.mrb[0].mxu0
          %820 = vmatprep.mubr.f32.mxu0 0.0
          %821 = vmatmul.mubr.f32.gmra.mrb[0].mxu0 %v696
          %v822 = vpop.f32.mrb[0].mxu0
          %v823 = vadd.f32 0.0, %v822
          %v824 = vpop.f32.mrb[0].mxu0
          %825 = vmatprep.mubr.f32.mxu0 0.0
          %826 = vmatmul.mubr.f32.gmra.mrb[0].mxu0 %v697
          %v827 = vpop.f32.mrb[0].mxu0
          %v828 = vadd.f32 0.0, %v827
          %v829 = vpop.f32.mrb[0].mxu0
          %830 = vmatprep.mubr.f32.mxu0 0.0
          %831 = vmatmul.mubr.f32.gmra.mrb[0].mxu0 %v698
          %v832 = vpop.f32.mrb[0].mxu0
          %v833 = vadd.f32 0.0, %v832
          %v834 = vpop.f32.mrb[0].mxu0
          %835 = vmatprep.mubr.f32.mxu0 0.0
          %836 = vmatmul.mubr.f32.gmra.mrb[0].mxu0 %v699
          %v837 = vpop.f32.mrb[0].mxu0
          %v838 = vadd.f32 0.0, %v837
          %v839 = vpop.f32.mrb[0].mxu0
          %840 = vmatprep.mubr.f32.mxu0 0.0
          %841 = vmatmul.mubr.f32.gmra.mrb[0].mxu0 %v700
          %v842 = vpop.f32.mrb[0].mxu0
          %v843 = vadd.f32 0.0, %v842
          %v844 = vpop.f32.mrb[0].mxu0
          %845 = vmatprep.mubr.f32.mxu0 0.0
          %846 = vmatmul.mubr.f32.gmra.mrb[0].mxu0 %v701
          %v847 = vpop.f32.mrb[0].mxu0
          %v848 = vadd.f32 0.0, %v847
          %v849 = vpop.f32.mrb[0].mxu0
          %850 = vmatprep.mubr.f32.mxu0 0.0
          %851 = vmatmul.mubr.f32.gmra.mrb[0].mxu0 %v702
          %v852 = vpop.f32.mrb[0].mxu0
          %v853 = vadd.f32 0.0, %v852
          %v854 = vpop.f32.mrb[0].mxu0
          %855 = vmatprep.mubr.f32.mxu0 0.0
          %856 = vmatmul.mubr.f32.gmra.mrb[0].mxu0 %v703
          %v857 = vpop.f32.mrb[0].mxu0
          %v858 = vadd.f32 0.0, %v857
          %v859 = vpop.f32.mrb[0].mxu0
          %860 = vmatprep.mubr.f32.mxu0 0.0
          %861 = vmatmul.mubr.f32.gmra.mrb[0].mxu0 %v704
          %v862 = vpop.f32.mrb[0].mxu0
          %v863 = vadd.f32 0.0, %v862
          %v864 = vpop.f32.mrb[0].mxu0
          %865 = vdwg.mxu0
          %866 = vmatprep.subr.mxu0 0.0
          %867 = vmatpush1.msra.mxu0 %v673
          %868 = vmatprep.subr.mxu0 0.0
          %869 = vmatpush1.msra.mxu0 %v674
          %870 = vmatprep.subr.mxu0 0.0
          %871 = vmatpush1.msra.mxu0 %v675
          %872 = vmatprep.subr.mxu0 0.0
          %873 = vmatpush1.msra.mxu0 %v676
          %874 = vmatprep.subr.mxu0 0.0
          %875 = vmatpush1.msra.mxu0 %v677
          %876 = vmatprep.subr.mxu0 0.0
          %877 = vmatpush1.msra.mxu0 %v678
          %878 = vmatprep.subr.mxu0 0.0
          %879 = vmatpush1.msra.mxu0 %v679
          %880 = vmatprep.subr.mxu0 0.0
          %881 = vmatpush1.msra.mxu0 %v680
          %882 = vmatprep.subr.mxu0 0.0
          %883 = vmatpush1.msra.mxu0 %v681
          %884 = vmatprep.subr.mxu0 0.0
          %885 = vmatpush1.msra.mxu0 %v682
          %886 = vmatprep.subr.mxu0 0.0
          %887 = vmatpush1.msra.mxu0 %v683
          %888 = vmatprep.subr.mxu0 0.0
          %889 = vmatpush1.msra.mxu0 %v684
          %890 = vmatprep.subr.mxu0 0.0
          %891 = vmatpush1.msra.mxu0 %v685
          %892 = vmatprep.subr.mxu0 0.0
          %893 = vmatpush1.msra.mxu0 %v686
          %894 = vmatprep.subr.mxu0 0.0
          %895 = vmatpush1.msra.mxu0 %v687
          %896 = vmatprep.subr.mxu0 0.0
          %897 = vmatpush1.msra.mxu0 %v688
          %898 = vmatprep.subr.mxu0 0.0
          %899 = vmatpush1.msra.mxu0 0.0
          %900 = vmatprep.subr.mxu0 0.0
          %901 = vmatpush1.msra.mxu0 0.0
          %902 = vmatprep.subr.mxu0 0.0
          %903 = vmatpush1.msra.mxu0 0.0
          %904 = vmatprep.subr.mxu0 0.0
          %905 = vmatpush1.msra.mxu0 0.0
          %906 = vmatprep.subr.mxu0 0.0
          %907 = vmatpush1.msra.mxu0 0.0
          %908 = vmatprep.subr.mxu0 0.0
          %909 = vmatpush1.msra.mxu0 0.0
          %910 = vmatprep.subr.mxu0 0.0
          %911 = vmatpush1.msra.mxu0 0.0
          %912 = vmatprep.subr.mxu0 0.0
          %913 = vmatpush1.msra.mxu0 0.0
          %914 = vmatprep.subr.mxu0 0.0
          %915 = vmatpush1.msra.mxu0 0.0
          %916 = vmatprep.subr.mxu0 0.0
          %917 = vmatpush1.msra.mxu0 0.0
          %918 = vmatprep.subr.mxu0 0.0
          %919 = vmatpush1.msra.mxu0 0.0
          %920 = vmatprep.subr.mxu0 0.0
          %921 = vmatpush1.msra.mxu0 0.0
          %922 = vmatprep.subr.mxu0 0.0
          %923 = vmatpush1.msra.mxu0 0.0
          %924 = vmatprep.subr.mxu0 0.0
          %925 = vmatpush1.msra.mxu0 0.0
          %926 = vmatprep.subr.mxu0 0.0
          %927 = vmatpush1.msra.mxu0 0.0
          %928 = vmatprep.subr.mxu0 0.0
          %929 = vmatpush1.msra.mxu0 0.0
          %930 = vmatprep.mubr.f32.mxu0 0.0
          %931 = vmatmul.mubr.f32.gmra.mrb[0].mxu0 %v657
          %v932 = vpop.f32.mrb[0].mxu0
          %v933 = vadd.f32 %v788, %v932
          %v934 = vpop.f32.mrb[0].mxu0
          %935 = vmatprep.mubr.f32.mxu0 0.0
          %936 = vmatmul.mubr.f32.gmra.mrb[0].mxu0 %v658
          %v937 = vpop.f32.mrb[0].mxu0
          %v938 = vadd.f32 %v793, %v937
          %v939 = vpop.f32.mrb[0].mxu0
          %940 = vmatprep.mubr.f32.mxu0 0.0
          %941 = vmatmul.mubr.f32.gmra.mrb[0].mxu0 %v659
          %v942 = vpop.f32.mrb[0].mxu0
          %v943 = vadd.f32 %v798, %v942
          %v944 = vpop.f32.mrb[0].mxu0
          %945 = vmatprep.mubr.f32.mxu0 0.0
          %946 = vmatmul.mubr.f32.gmra.mrb[0].mxu0 %v660
          %v947 = vpop.f32.mrb[0].mxu0
          %v948 = vadd.f32 %v803, %v947
          %v949 = vpop.f32.mrb[0].mxu0
          %950 = vmatprep.mubr.f32.mxu0 0.0
          %951 = vmatmul.mubr.f32.gmra.mrb[0].mxu0 %v661
          %v952 = vpop.f32.mrb[0].mxu0
          %v953 = vadd.f32 %v808, %v952
          %v954 = vpop.f32.mrb[0].mxu0
          %955 = vmatprep.mubr.f32.mxu0 0.0
          %956 = vmatmul.mubr.f32.gmra.mrb[0].mxu0 %v662
          %v957 = vpop.f32.mrb[0].mxu0
          %v958 = vadd.f32 %v813, %v957
          %v959 = vpop.f32.mrb[0].mxu0
          %960 = vmatprep.mubr.f32.mxu0 0.0
          %961 = vmatmul.mubr.f32.gmra.mrb[0].mxu0 %v663
          %v962 = vpop.f32.mrb[0].mxu0
          %v963 = vadd.f32 %v818, %v962
          %v964 = vpop.f32.mrb[0].mxu0
          %965 = vmatprep.mubr.f32.mxu0 0.0
          %966 = vmatmul.mubr.f32.gmra.mrb[0].mxu0 %v664
          %v967 = vpop.f32.mrb[0].mxu0
          %v968 = vadd.f32 %v823, %v967
          %v969 = vpop.f32.mrb[0].mxu0
          %970 = vmatprep.mubr.f32.mxu0 0.0
          %971 = vmatmul.mubr.f32.gmra.mrb[0].mxu0 %v665
          %v972 = vpop.f32.mrb[0].mxu0
          %v973 = vadd.f32 %v828, %v972
          %v974 = vpop.f32.mrb[0].mxu0
          %975 = vmatprep.mubr.f32.mxu0 0.0
          %976 = vmatmul.mubr.f32.gmra.mrb[0].mxu0 %v666
          %v977 = vpop.f32.mrb[0].mxu0
          %v978 = vadd.f32 %v833, %v977
          %v979 = vpop.f32.mrb[0].mxu0
          %980 = vmatprep.mubr.f32.mxu0 0.0
          %981 = vmatmul.mubr.f32.gmra.mrb[0].mxu0 %v667
          %v982 = vpop.f32.mrb[0].mxu0
          %v983 = vadd.f32 %v838, %v982
          %v984 = vpop.f32.mrb[0].mxu0
          %985 = vmatprep.mubr.f32.mxu0 0.0
          %986 = vmatmul.mubr.f32.gmra.mrb[0].mxu0 %v668
          %v987 = vpop.f32.mrb[0].mxu0
          %v988 = vadd.f32 %v843, %v987
          %v989 = vpop.f32.mrb[0].mxu0
          %990 = vmatprep.mubr.f32.mxu0 0.0
          %991 = vmatmul.mubr.f32.gmra.mrb[0].mxu0 %v669
          %v992 = vpop.f32.mrb[0].mxu0
          %v993 = vadd.f32 %v848, %v992
          %v994 = vpop.f32.mrb[0].mxu0
          %995 = vmatprep.mubr.f32.mxu0 0.0
          %996 = vmatmul.mubr.f32.gmra.mrb[0].mxu0 %v670
          %v997 = vpop.f32.mrb[0].mxu0
          %v998 = vadd.f32 %v853, %v997
          %v999 = vpop.f32.mrb[0].mxu0
          %1000 = vmatprep.mubr.f32.mxu0 0.0
          %1001 = vmatmul.mubr.f32.gmra.mrb[0].mxu0 %v671
          %v1002 = vpop.f32.mrb[0].mxu0
          %v1003 = vadd.f32 %v858, %v1002
          %v1004 = vpop.f32.mrb[0].mxu0
          %1005 = vmatprep.mubr.f32.mxu0 0.0
          %1006 = vmatmul.mubr.f32.gmra.mrb[0].mxu0 %v672
          %v1007 = vpop.f32.mrb[0].mxu0
          %v1008 = vadd.f32 %v863, %v1007
          %v1009 = vpop.f32.mrb[0].mxu0
          %1010 = vdwg.mxu0
          %1011 = vst [vmem:[%s395] sm:$0xff] %v933
          %1012 = vst [vmem:[%s395 + $0x8] sm:$0xff] %v938
          %1013 = vst [vmem:[%s395 + $0x10] sm:$0xff] %v943
          %1014 = vst [vmem:[%s395 + $0x18] sm:$0xff] %v948
          %1015 = vst [vmem:[%s395 + $0x20] sm:$0xff] %v953
          %1016 = vst [vmem:[%s395 + $0x28] sm:$0xff] %v958
          %1017 = vst [vmem:[%s395 + $0x30] sm:$0xff] %v963
          %1018 = vst [vmem:[%s395 + $0x38] sm:$0xff] %v968
          %1019 = vst [vmem:[%s395 + $0x40] sm:$0xff] %v973
          %1020 = vst [vmem:[%s395 + $0x48] sm:$0xff] %v978
          %1021 = vst [vmem:[%s395 + $0x50] sm:$0xff] %v983
          %1022 = vst [vmem:[%s395 + $0x58] sm:$0xff] %v988
          %1023 = vst [vmem:[%s395 + $0x60] sm:$0xff] %v993
          %1024 = vst [vmem:[%s395 + $0x68] sm:$0xff] %v998
          %1025 = vst [vmem:[%s395 + $0x70] sm:$0xff] %v1003
          %1026 = vst [vmem:[%s395 + $0x78] sm:$0xff] %v1008
          %vm1027 = vcmp.gt.f32.partialorder %v657, 0.0
          %vm1028 = vcmp.gt.f32.partialorder %v658, 0.0
          %vm1029 = vcmp.gt.f32.partialorder %v659, 0.0
          %vm1030 = vcmp.gt.f32.partialorder %v660, 0.0
          %vm1031 = vcmp.gt.f32.partialorder %v661, 0.0
          %vm1032 = vcmp.gt.f32.partialorder %v662, 0.0
          %vm1033 = vcmp.gt.f32.partialorder %v663, 0.0
          %vm1034 = vcmp.gt.f32.partialorder %v664, 0.0
          %vm1035 = vcmp.gt.f32.partialorder %v665, 0.0
          %vm1036 = vcmp.gt.f32.partialorder %v666, 0.0
          %vm1037 = vcmp.gt.f32.partialorder %v667, 0.0
          %vm1038 = vcmp.gt.f32.partialorder %v668, 0.0
          %vm1039 = vcmp.gt.f32.partialorder %v669, 0.0
          %vm1040 = vcmp.gt.f32.partialorder %v670, 0.0
          %vm1041 = vcmp.gt.f32.partialorder %v671, 0.0
          %vm1042 = vcmp.gt.f32.partialorder %v672, 0.0
          %v1043 = vsel %vm1027, 0.0, -9e+15
          %v1044 = vsel %vm1028, 0.0, -9e+15
          %v1045 = vsel %vm1029, 0.0, -9e+15
          %v1046 = vsel %vm1030, 0.0, -9e+15
          %v1047 = vsel %vm1031, 0.0, -9e+15
          %v1048 = vsel %vm1032, 0.0, -9e+15
          %v1049 = vsel %vm1033, 0.0, -9e+15
          %v1050 = vsel %vm1034, 0.0, -9e+15
          %v1051 = vsel %vm1035, 0.0, -9e+15
          %v1052 = vsel %vm1036, 0.0, -9e+15
          %v1053 = vsel %vm1037, 0.0, -9e+15
          %v1054 = vsel %vm1038, 0.0, -9e+15
          %v1055 = vsel %vm1039, 0.0, -9e+15
          %v1056 = vsel %vm1040, 0.0, -9e+15
          %v1057 = vsel %vm1041, 0.0, -9e+15
          %v1058 = vsel %vm1042, 0.0, -9e+15
          %v1059 = vpack.c.bf16 %v1044, %v1043
          %v1060 = vpack.c.bf16 %v1046, %v1045
          %v1061 = vpack.c.bf16 %v1048, %v1047
          %v1062 = vpack.c.bf16 %v1050, %v1049
          %v1063 = vpack.c.bf16 %v1052, %v1051
          %v1064 = vpack.c.bf16 %v1054, %v1053
          %v1065 = vpack.c.bf16 %v1056, %v1055
          %v1066 = vpack.c.bf16 %v1058, %v1057
          %v1075 = vunpack.c.l.b16 %v1059
          %v1076 = vunpack.c.h.b16 %v1059
          %v1077 = vunpack.c.l.b16 %v1060
          %v1078 = vunpack.c.h.b16 %v1060
          %v1079 = vunpack.c.l.b16 %v1061
          %v1080 = vunpack.c.h.b16 %v1061
          %v1081 = vunpack.c.l.b16 %v1062
          %v1082 = vunpack.c.h.b16 %v1062
          %v1083 = vunpack.c.l.b16 %v1063
          %v1084 = vunpack.c.h.b16 %v1063
          %v1085 = vunpack.c.l.b16 %v1064
          %v1086 = vunpack.c.h.b16 %v1064
          %v1087 = vunpack.c.l.b16 %v1065
          %v1088 = vunpack.c.h.b16 %v1065
          %v1089 = vunpack.c.l.b16 %v1066
          %v1090 = vunpack.c.h.b16 %v1066
          %v1091 = vpack.c.b16 %v1075, %v1075
          %v1092 = vpack.c.b16 %v1076, %v1076
          %v1093 = vpack.c.b16 %v1077, %v1077
          %v1094 = vpack.c.b16 %v1078, %v1078
          %v1095 = vpack.c.b16 %v1079, %v1079
          %v1096 = vpack.c.b16 %v1080, %v1080
          %v1097 = vpack.c.b16 %v1081, %v1081
          %v1098 = vpack.c.b16 %v1082, %v1082
          %v1099 = vpack.c.b16 %v1083, %v1083
          %v1100 = vpack.c.b16 %v1084, %v1084
          %v1101 = vpack.c.b16 %v1085, %v1085
          %v1102 = vpack.c.b16 %v1086, %v1086
          %v1103 = vpack.c.b16 %v1087, %v1087
          %v1104 = vpack.c.b16 %v1088, %v1088
          %v1105 = vpack.c.b16 %v1089, %v1089
          %v1106 = vpack.c.b16 %v1090, %v1090
          %1123 = vst [vmem:[%s402] sm:$0xf] %v1091
          %1124 = vst [vmem:[%s402 + $0x8] sm:$0xf] %v1092
          %1125 = vst [vmem:[%s402 + $0x10] sm:$0xf] %v1093
          %1126 = vst [vmem:[%s402 + $0x18] sm:$0xf] %v1094
          %1127 = vst [vmem:[%s402 + $0x20] sm:$0xf] %v1095
          %1128 = vst [vmem:[%s402 + $0x28] sm:$0xf] %v1096
          %1129 = vst [vmem:[%s402 + $0x30] sm:$0xf] %v1097
          %1130 = vst [vmem:[%s402 + $0x38] sm:$0xf] %v1098
          %1131 = vst [vmem:[%s402 + $0x40] sm:$0xf] %v1099
          %1132 = vst [vmem:[%s402 + $0x48] sm:$0xf] %v1100
          %1133 = vst [vmem:[%s402 + $0x50] sm:$0xf] %v1101
          %1134 = vst [vmem:[%s402 + $0x58] sm:$0xf] %v1102
          %1135 = vst [vmem:[%s402 + $0x60] sm:$0xf] %v1103
          %1136 = vst [vmem:[%s402 + $0x68] sm:$0xf] %v1104
          %1137 = vst [vmem:[%s402 + $0x70] sm:$0xf] %v1105
          %1138 = vst [vmem:[%s402 + $0x78] sm:$0xf] %v1106
          %v1139 = vld [vmem:[%s351] sm:$0xff]
          %v1140 = vld [vmem:[%s351 + $0x8] sm:$0xff]
          %v1141 = vld [vmem:[%s351 + $0x10] sm:$0xff]
          %v1142 = vld [vmem:[%s351 + $0x18] sm:$0xff]
          %v1143 = vld [vmem:[%s351 + $0x20] sm:$0xff]
          %v1144 = vld [vmem:[%s351 + $0x28] sm:$0xff]
          %v1145 = vld [vmem:[%s351 + $0x30] sm:$0xff]
          %v1146 = vld [vmem:[%s351 + $0x38] sm:$0xff]
          %v1147 = vld [vmem:[%s351 + $0x40] sm:$0xff]
          %v1148 = vld [vmem:[%s351 + $0x48] sm:$0xff]
          %v1149 = vld [vmem:[%s351 + $0x50] sm:$0xff]
          %v1150 = vld [vmem:[%s351 + $0x58] sm:$0xff]
          %v1151 = vld [vmem:[%s351 + $0x60] sm:$0xff]
          %v1152 = vld [vmem:[%s351 + $0x68] sm:$0xff]
          %v1153 = vld [vmem:[%s351 + $0x70] sm:$0xff]
          %v1154 = vld [vmem:[%s351 + $0x78] sm:$0xff]
          %vm1155 = vcmp.gt.f32.partialorder %v1139, 0.0
          %vm1156 = vcmp.gt.f32.partialorder %v1140, 0.0
          %vm1157 = vcmp.gt.f32.partialorder %v1141, 0.0
          %vm1158 = vcmp.gt.f32.partialorder %v1142, 0.0
          %vm1159 = vcmp.gt.f32.partialorder %v1143, 0.0
          %vm1160 = vcmp.gt.f32.partialorder %v1144, 0.0
          %vm1161 = vcmp.gt.f32.partialorder %v1145, 0.0
          %vm1162 = vcmp.gt.f32.partialorder %v1146, 0.0
          %vm1163 = vcmp.gt.f32.partialorder %v1147, 0.0
          %vm1164 = vcmp.gt.f32.partialorder %v1148, 0.0
          %vm1165 = vcmp.gt.f32.partialorder %v1149, 0.0
          %vm1166 = vcmp.gt.f32.partialorder %v1150, 0.0
          %vm1167 = vcmp.gt.f32.partialorder %v1151, 0.0
          %vm1168 = vcmp.gt.f32.partialorder %v1152, 0.0
          %vm1169 = vcmp.gt.f32.partialorder %v1153, 0.0
          %vm1170 = vcmp.gt.f32.partialorder %v1154, 0.0
          %v1171 = vsel %vm1155, 0.0, -9e+15
          %v1172 = vsel %vm1156, 0.0, -9e+15
          %v1173 = vsel %vm1157, 0.0, -9e+15
          %v1174 = vsel %vm1158, 0.0, -9e+15
          %v1175 = vsel %vm1159, 0.0, -9e+15
          %v1176 = vsel %vm1160, 0.0, -9e+15
          %v1177 = vsel %vm1161, 0.0, -9e+15
          %v1178 = vsel %vm1162, 0.0, -9e+15
          %v1179 = vsel %vm1163, 0.0, -9e+15
          %v1180 = vsel %vm1164, 0.0, -9e+15
          %v1181 = vsel %vm1165, 0.0, -9e+15
          %v1182 = vsel %vm1166, 0.0, -9e+15
          %v1183 = vsel %vm1167, 0.0, -9e+15
          %v1184 = vsel %vm1168, 0.0, -9e+15
          %v1185 = vsel %vm1169, 0.0, -9e+15
          %v1186 = vsel %vm1170, 0.0, -9e+15
          %v1187 = vpack.c.bf16 %v1172, %v1171
          %v1188 = vpack.c.bf16 %v1174, %v1173
          %v1189 = vpack.c.bf16 %v1176, %v1175
          %v1190 = vpack.c.bf16 %v1178, %v1177
          %v1191 = vpack.c.bf16 %v1180, %v1179
          %v1192 = vpack.c.bf16 %v1182, %v1181
          %v1193 = vpack.c.bf16 %v1184, %v1183
          %v1194 = vpack.c.bf16 %v1186, %v1185
          %v1203 = vunpack.c.l.b16 %v1187
          %v1204 = vunpack.c.h.b16 %v1187
          %v1205 = vunpack.c.l.b16 %v1188
          %v1206 = vunpack.c.h.b16 %v1188
          %v1207 = vunpack.c.l.b16 %v1189
          %v1208 = vunpack.c.h.b16 %v1189
          %v1209 = vunpack.c.l.b16 %v1190
          %v1210 = vunpack.c.h.b16 %v1190
          %v1211 = vunpack.c.l.b16 %v1191
          %v1212 = vunpack.c.h.b16 %v1191
          %v1213 = vunpack.c.l.b16 %v1192
          %v1214 = vunpack.c.h.b16 %v1192
          %v1215 = vunpack.c.l.b16 %v1193
          %v1216 = vunpack.c.h.b16 %v1193
          %v1217 = vunpack.c.l.b16 %v1194
          %v1218 = vunpack.c.h.b16 %v1194
          %v1219 = vpack.c.b16 %v1203, %v1203
          %v1220 = vpack.c.b16 %v1204, %v1204
          %v1221 = vpack.c.b16 %v1205, %v1205
          %v1222 = vpack.c.b16 %v1206, %v1206
          %v1223 = vpack.c.b16 %v1207, %v1207
          %v1224 = vpack.c.b16 %v1208, %v1208
          %v1225 = vpack.c.b16 %v1209, %v1209
          %v1226 = vpack.c.b16 %v1210, %v1210
          %v1227 = vpack.c.b16 %v1211, %v1211
          %v1228 = vpack.c.b16 %v1212, %v1212
          %v1229 = vpack.c.b16 %v1213, %v1213
          %v1230 = vpack.c.b16 %v1214, %v1214
          %v1231 = vpack.c.b16 %v1215, %v1215
          %v1232 = vpack.c.b16 %v1216, %v1216
          %v1233 = vpack.c.b16 %v1217, %v1217
          %v1234 = vpack.c.b16 %v1218, %v1218
          %1251 = vst [vmem:[%s402 + $0x4] sm:$0xf] %v1219
          %1252 = vst [vmem:[%s402 + $0xc] sm:$0xf] %v1220
          %1253 = vst [vmem:[%s402 + $0x14] sm:$0xf] %v1221
          %1254 = vst [vmem:[%s402 + $0x1c] sm:$0xf] %v1222
          %1255 = vst [vmem:[%s402 + $0x24] sm:$0xf] %v1223
          %1256 = vst [vmem:[%s402 + $0x2c] sm:$0xf] %v1224
          %1257 = vst [vmem:[%s402 + $0x34] sm:$0xf] %v1225
          %1258 = vst [vmem:[%s402 + $0x3c] sm:$0xf] %v1226
          %1259 = vst [vmem:[%s402 + $0x44] sm:$0xf] %v1227
          %1260 = vst [vmem:[%s402 + $0x4c] sm:$0xf] %v1228
          %1261 = vst [vmem:[%s402 + $0x54] sm:$0xf] %v1229
          %1262 = vst [vmem:[%s402 + $0x5c] sm:$0xf] %v1230
          %1263 = vst [vmem:[%s402 + $0x64] sm:$0xf] %v1231
          %1264 = vst [vmem:[%s402 + $0x6c] sm:$0xf] %v1232
          %1265 = vst [vmem:[%s402 + $0x74] sm:$0xf] %v1233
          %1266 = vst [vmem:[%s402 + $0x7c] sm:$0xf] %v1234
        $region68: #{tpu_custom_call.1} parent=39 // pred_fallthru
          _
        %s1267 = sand.u32 %s173, 1
        %s1268 = scalar_lea.sflag [#allocation5], %s1267
        %s1269 = sand.u32 %s173, 1
        %s1270 = smul.addr %s1269, 128
        %s1271 = scalar_lea.vmem [#allocation12], %s1270
        %s1272 = sand.u32 %s199, 1
        %s1273 = scalar_lea.sflag [#allocation14], %s1272
        %s1274 = sand.u32 %s199, 1
        %s1275 = smul.addr %s1274, 128
        %s1276 = scalar_lea.vmem [#allocation13], %s1275
        // Predicated region
        $region69: #{tpu_custom_call.1} parent=39 // pred_check
          %p1277 = pneg %p183
        $region70: #{tpu_custom_call.1} parent=39 // pred_check_branch
          %1279 = sbr.rel (%p1277) target = $region72
        $region71: #{tpu_custom_call.1} parent=39 // pred_region
          %s1280 = smul.u32 16, %s35
          %s1282 = ssub.s32 2048, 2048
          %1283 = vsyncadd %s1268, %s1282
          %s1284 = smul.addr %s1280, 128
          %s1285 = scalar_lea.hbm %s5, %s1284
          %s1286 = sshll.u32 %s1271, 4
          %s1287 = int_to_ptr.vmem [resolvable:$true] %s1286
          %1292 = dma.vmem_to_hbm [thread:$0]  %s1287, 2048, %s1285, %s1268, 128, 128, 8
        $region72: #{tpu_custom_call.1} parent=39 // pred_fallthru
          _
        // Predicated region
        $region73: #{tpu_custom_call.1} parent=39 // pred_check
          %p1293 = pneg %p209
        $region74: #{tpu_custom_call.1} parent=39 // pred_check_branch
          %1295 = sbr.rel (%p1293) target = $region76
        $region75: #{tpu_custom_call.1} parent=39 // pred_region
          %s1296 = smul.u32 16, %s35
          %s1298 = ssub.s32 2048, 2048
          %1299 = vsyncadd %s1273, %s1298
          %s1300 = smul.addr %s1296, 2
          %s1301 = smul.addr %s1300, 64
          %s1302 = scalar_lea.hbm %s6, %s1301
          %s1303 = sshll.u32 %s1276, 4
          %s1304 = int_to_ptr.vmem [resolvable:$true] %s1303
          %1309 = dma.vmem_to_hbm [thread:$0]  %s1304, 2048, %s1302, %s1273, 128, 128, 8
        $region76: #{tpu_custom_call.1} parent=39 // pred_fallthru
          _
      $region40: #{tpu_custom_call.1} parent=5 // pred_fallthru
        _
      %p1310 = scmp.le.s32.totalorder 2, %s26
      // Predicated region
      $region77: #{tpu_custom_call.1} parent=5 // pred_check
        %p1311 = pneg %p1310
      $region78: #{tpu_custom_call.1} parent=5 // pred_check_branch
        %1313 = sbr.rel (%p1311) target = $region80
      $region79: #{tpu_custom_call.1} parent=5 // pred_region
        %s1314 = ssub.s32 %s26, 2
        // Predicated region
        $region81: #{tpu_custom_call.1} parent=79 // pred_check
          %p1315 = pneg %p189
        $region82: #{tpu_custom_call.1} parent=79 // pred_check_branch
          %1317 = sbr.rel (%p1315) target = $region84
        $region83: #{tpu_custom_call.1} parent=79 // pred_region
          %s1318 = sand.u32 %s174, 1
          %s1319 = scalar_lea.sflag [#allocation5], %s1318
          %s1320 = sand.u32 %s174, 1
          %s1321 = smul.addr %s1320, 128
          %s1322 = scalar_lea.vmem [#allocation12], %s1321
          %1323 = dma.done %s1319, 2048
        $region84: #{tpu_custom_call.1} parent=79 // pred_fallthru
          _
        // Predicated region
        $region85: #{tpu_custom_call.1} parent=79 // pred_check
          %p1324 = pneg %p215
        $region86: #{tpu_custom_call.1} parent=79 // pred_check_branch
          %1326 = sbr.rel (%p1324) target = $region88
        $region87: #{tpu_custom_call.1} parent=79 // pred_region
          %s1327 = sand.u32 %s200, 1
          %s1328 = scalar_lea.sflag [#allocation14], %s1327
          %s1329 = sand.u32 %s200, 1
          %s1330 = smul.addr %s1329, 128
          %s1331 = scalar_lea.vmem [#allocation13], %s1330
          %1332 = dma.done %s1328, 2048
        $region88: #{tpu_custom_call.1} parent=79 // pred_fallthru
          _
      $region80: #{tpu_custom_call.1} parent=5 // pred_fallthru
        _
    $region6: #{tpu_custom_call.1} parent=1 // loop_footer
      %s30 = sadd.s32 1, %s26
    $region7: #{tpu_custom_call.1} parent=1 // loop_footer_branch
      %25 = sbr.rel target = $region3
    $region8: #{tpu_custom_call.1} parent=1 // loop_exit
      _
    %1333 = vsyncpa [#allocation4], 1
    %s1334 = scalar_lea.sflag [#allocation4], 1
    %1335 = vsyncpa %s1334, 1
    %1336 = vsyncpa [#allocation7], 1
    %s1337 = scalar_lea.sflag [#allocation7], 1
    %1338 = vsyncpa %s1337, 1
    %1339 = vsyncpa [#allocation10], 1
    %1340 = vsyncpa [#allocation5], 1
    %s1341 = scalar_lea.sflag [#allocation5], 1
    %1342 = vsyncpa %s1341, 1
    %1343 = vsyncpa [#allocation14], 1
    %s1344 = scalar_lea.sflag [#allocation14], 1
    %1345 = vsyncpa %s1344, 1

</llo_original>
